<compile_context>
chip_gen: v6e
topology: v6e:2x2x1
jax: 0.10.0
libtpu: 0.0.40
codegen_flags: <defaults>
</compile_context>

<pallas_src>
import jax
import jax.numpy as jnp
from jax import lax
from jax.experimental import pallas as pl
from jax.experimental.pallas import tpu as pltpu

LANE = 128  # TPU lane width


def _dwconv_kernel(x_ref, up_ref, dn_ref, w_ref, b_ref, o_ref, xp_ref):
    # x_ref : (1, TH, W, TC)       main input tile
    # up_ref: (1, 1, W, TC)        row above the tile (clamped; zeroed at top edge)
    # dn_ref: (1, 1, W, TC)        row below the tile (clamped; zeroed at bottom edge)
    # w_ref : (3, 3, TC)           depthwise filter taps
    # b_ref : (1, 1, 1, TC)        bias
    # o_ref : (1, TH, W, TC)       output tile
    # xp_ref: (1, TH+2, W+2, TC)   f32 scratch: zero-padded (halo) tile
    TH = o_ref.shape[1]
    W = o_ref.shape[2]
    TC = o_ref.shape[3]
    h = pl.program_id(2)
    n_h = pl.num_programs(2)
    f32 = jnp.float32

    # --- assemble zero-padded tile once (single upcast to f32) --------------
    xp_ref[:, 1:TH + 1, 1:W + 1, :] = x_ref[...].astype(f32)
    zero_row = jnp.zeros((1, 1, W, TC), f32)
    xp_ref[:, 0:1, 1:W + 1, :] = jnp.where(h > 0, up_ref[...].astype(f32), zero_row)
    xp_ref[:, TH + 1:TH + 2, 1:W + 1, :] = jnp.where(
        h < n_h - 1, dn_ref[...].astype(f32), zero_row)
    zero_col = jnp.zeros((1, TH + 2, 1, TC), f32)
    xp_ref[:, :, 0:1, :] = zero_col
    xp_ref[:, :, W + 1:W + 2, :] = zero_col

    # --- 9-tap MAC on the VPU; accumulator starts from the bias broadcast ---
    acc = jnp.broadcast_to(b_ref[...].astype(f32), (1, TH, W, TC))
    # TODO(synk): the dw=0/2 taps are unaligned-sublane slices; pltpu.roll along
    # the W axis (XLU slot) + edge mask could shave another ~5-15% when compute-bound.
    for dh in range(3):
        for dw in range(3):
            tap = xp_ref[:, dh:dh + TH, dw:dw + W, :]
            acc = acc + tap * w_ref[dh, dw, :].astype(f32)
    o_ref[...] = acc.astype(o_ref.dtype)


def _pick_th(H, W, TC, budget_bytes=2 * 1024 * 1024):
    """Largest divisor of H whose padded f32 scratch tile fits the budget."""
    best = 1
    for th in range(1, H + 1):
        if H % th == 0 and (th + 2) * (W + 2) * TC * 4 <= budget_bytes:
            best = th
    return best


def dwconv_pallas_nhwc(x_nhwc, w_hwc, bias_c):
    """Depthwise conv2d 3x3, stride 1, pad 1, groups=C, bias. NHWC in/out.

    x_nhwc: (B, H, W, C)
    w_hwc:  (3, 3, C)
    bias_c: (C,)
    returns (B, H, W, C)
    """
    B, H, W, C = x_nhwc.shape
    dtype = x_nhwc.dtype

    # Channels ride the lane axis.  Pad C to a multiple of 128 so every VPU op
    # and store is lane-dense; this is a no-op for typical dims (e.g. 768).
    TC = LANE
    Cp = ((C + TC - 1) // TC) * TC
    if Cp != C:
        x_nhwc = jnp.pad(x_nhwc, ((0, 0), (0, 0), (0, 0), (0, Cp - C)))
        w_hwc = jnp.pad(w_hwc, ((0, 0), (0, 0), (0, Cp - C)))
        bias_c = jnp.pad(bias_c, ((0, Cp - C),))
    b4 = bias_c.reshape(1, 1, 1, Cp)

    TH = _pick_th(H, W, TC)
    n_h = H // TH
    n_c = Cp // TC
    grid = (B, n_c, n_h)

    # Main tile plus two 1-row halo views of the same input array (clamped at
    # the image edges; the kernel zero-masks them there), so no jnp.pad copy.
    x_main_spec = pl.BlockSpec((1, TH, W, TC), lambda b, c, h: (b, h, 0, c))
    x_up_spec = pl.BlockSpec(
        (1, 1, W, TC), lambda b, c, h: (b, jnp.maximum(h * TH - 1, 0), 0, c))
    x_dn_spec = pl.BlockSpec(
        (1, 1, W, TC), lambda b, c, h: (b, jnp.minimum(h * TH + TH, H - 1), 0, c))
    w_spec = pl.BlockSpec((3, 3, TC), lambda b, c, h: (0, 0, c))
    b_spec = pl.BlockSpec((1, 1, 1, TC), lambda b, c, h: (0, 0, 0, c))
    o_spec = pl.BlockSpec((1, TH, W, TC), lambda b, c, h: (b, h, 0, c))

    out = pl.pallas_call(
        _dwconv_kernel,
        out_shape=jax.ShapeDtypeStruct((B, H, W, Cp), dtype),
        grid_spec=pltpu.PrefetchScalarGridSpec(
            num_scalar_prefetch=0,
            grid=grid,
            in_specs=[x_main_spec, x_up_spec, x_dn_spec, w_spec, b_spec],
            out_specs=o_spec,
            scratch_shapes=[pltpu.VMEM((1, TH + 2, W + 2, TC), jnp.float32)],
        ),
        compiler_params=pltpu.CompilerParams(
            dimension_semantics=("parallel", "parallel", "parallel"),
            vmem_limit_bytes=32 * 1024 * 1024,
        ),
    )(x_nhwc, x_nhwc, x_nhwc, w_hwc, b4)

    if Cp != C:
        out = out[..., :C]
    return out


def dwconv_pallas(x_nchw, weight_c133, bias_c):
    """PyTorch-parity wrapper: NCHW in/out, weight (C,1,3,3), bias (C,).

    NOTE: in a full model keep activations NHWC end-to-end and call
    dwconv_pallas_nhwc directly; the transposes here exist only to match the
    PyTorch NCHW interface for testing.
    """
    x_nhwc = jnp.transpose(x_nchw, (0, 2, 3, 1))
    w_hwc = jnp.transpose(weight_c133[:, 0, :, :], (1, 2, 0))  # (3, 3, C)
    out_nhwc = dwconv_pallas_nhwc(x_nhwc, w_hwc, bias_c)
    return jnp.transpose(out_nhwc, (0, 3, 1, 2))


def dwconv_reference(x_nchw, weight_c133, bias_c):
    C = x_nchw.shape[1]
    out = lax.conv_general_dilated(
        x_nchw, weight_c133,
        window_strides=(1, 1),
        padding=((1, 1), (1, 1)),
        dimension_numbers=("NCHW", "OIHW", "NCHW"),
        feature_group_count=C,
    )
    return out + bias_c.reshape(1, C, 1, 1)


if __name__ == "__main__":
    # --- primary config: matches DWConv(dim=C) applied to NCHW input --------
    B, C, H, W = 2, 4, 16, 16
    kx, kw, kb = jax.random.split(jax.random.PRNGKey(0), 3)
    x = jax.random.normal(kx, (B, C, H, W), dtype=jnp.float32)
    weight = jax.random.normal(kw, (C, 1, 3, 3), dtype=jnp.float32) * 0.1
    bias = jax.random.normal(kb, (C,), dtype=jnp.float32) * 0.1

    out = jax.block_until_ready(dwconv_pallas(x, weight, bias))
    ref = jax.block_until_ready(dwconv_reference(x, weight, bias))
    assert out.shape == (B, C, H, W)
    assert jnp.allclose(out, ref, atol=1e-5, rtol=1e-5), "f32 mismatch vs reference conv"

    # --- secondary config: bf16 input, channels not a multiple of 128 -------
    B2, C2, H2, W2 = 1, 96, 8, 8
    k2x, k2w, k2b = jax.random.split(jax.random.PRNGKey(1), 3)
    x2 = jax.random.normal(k2x, (B2, C2, H2, W2), dtype=jnp.float32).astype(jnp.bfloat16)
    w2 = (jax.random.normal(k2w, (C2, 1, 3, 3), dtype=jnp.float32) * 0.1).astype(jnp.bfloat16)
    b2 = (jax.random.normal(k2b, (C2,), dtype=jnp.float32) * 0.1).astype(jnp.bfloat16)

    out2 = jax.block_until_ready(dwconv_pallas(x2, w2, b2))
    ref2 = dwconv_reference(x2.astype(jnp.float32), w2.astype(jnp.float32),
                            b2.astype(jnp.float32))
    assert out2.shape == (B2, C2, H2, W2)
    assert jnp.allclose(out2.astype(jnp.float32), ref2, atol=1e-2, rtol=1e-2), \
        "bf16 mismatch vs reference conv"

    print("KERNEL_OK")
</pallas_src>

<mosaic_0001>
module attributes {stable_mosaic.version = 11 : i64} {
  func.func @_dwconv_kernel(%arg0: i32, %arg1: i32, %arg2: i32, %arg3: memref<1x16x16x128xf32, #tpu.memory_space<vmem>>, %arg4: memref<1x1x16x128xf32, #tpu.memory_space<vmem>>, %arg5: memref<1x1x16x128xf32, #tpu.memory_space<vmem>>, %arg6: memref<3x3x128xf32, #tpu.memory_space<vmem>>, %arg7: memref<1x1x1x128xf32, #tpu.memory_space<vmem>>, %arg8: memref<1x16x16x128xf32, #tpu.memory_space<vmem>>, %arg9: memref<1x18x18x128xf32, #tpu.memory_space<vmem>>) attributes {dimension_semantics = [#tpu.dimension_semantics<parallel>, #tpu.dimension_semantics<parallel>, #tpu.dimension_semantics<parallel>], iteration_bounds = array<i64: 2, 1, 1>, scalar_prefetch = 0 : i64, scratch_operands = 1 : i64, tpu.core_type = #tpu.core_type<tc>, window_params = [{transform_indices = @transform_0, window_bounds = array<i64: 1, 16, 16, 128>}, {transform_indices = @transform_1, window_bounds = array<i64: 1, 1, 16, 128>}, {transform_indices = @transform_2, window_bounds = array<i64: 1, 1, 16, 128>}, {transform_indices = @transform_3, window_bounds = array<i64: 3, 3, 128>}, {transform_indices = @transform_4, window_bounds = array<i64: 1, 1, 1, 128>}, {transform_indices = @transform_5, window_bounds = array<i64: 1, 16, 16, 128>}]} {
    %c0 = arith.constant 0 : index
    %c0_0 = arith.constant 0 : index
    %c0_1 = arith.constant 0 : index
    %c0_2 = arith.constant 0 : index
    %0 = vector.load %arg3[%c0, %c0_0, %c0_1, %c0_2] : memref<1x16x16x128xf32, #tpu.memory_space<vmem>>, vector<1x16x16x128xf32>
    %c0_3 = arith.constant 0 : index
    %c1 = arith.constant 1 : index
    %c1_4 = arith.constant 1 : index
    %c0_5 = arith.constant 0 : index
    %1 = vector.load %arg9[%c0_3, %c1, %c1_4, %c0_5] : memref<1x18x18x128xf32, #tpu.memory_space<vmem>>, vector<1x16x16x128xf32>
    tpu.vector_store %arg9[%c0_3, %c1, %c1_4, %c0_5], %0 {strides = array<i32>} : memref<1x18x18x128xf32, #tpu.memory_space<vmem>>, vector<1x16x16x128xf32>,
    %cst = arith.constant 0.000000e+00 : f32
    %2 = vector.broadcast %cst : f32 to vector<1x1x16x128xf32>
    %c0_i32 = arith.constant 0 : i32
    %3 = arith.cmpi sgt, %arg2, %c0_i32 : i32
    %c0_6 = arith.constant 0 : index
    %c0_7 = arith.constant 0 : index
    %c0_8 = arith.constant 0 : index
    %c0_9 = arith.constant 0 : index
    %4 = vector.load %arg4[%c0_6, %c0_7, %c0_8, %c0_9] : memref<1x1x16x128xf32, #tpu.memory_space<vmem>>, vector<1x1x16x128xf32>
    %5 = arith.select %3, %4, %2 : vector<1x1x16x128xf32>
    %c0_10 = arith.constant 0 : index
    %c0_11 = arith.constant 0 : index
    %c1_12 = arith.constant 1 : index
    %c0_13 = arith.constant 0 : index
    %6 = vector.load %arg9[%c0_10, %c0_11, %c1_12, %c0_13] : memref<1x18x18x128xf32, #tpu.memory_space<vmem>>, vector<1x1x16x128xf32>
    tpu.vector_store %arg9[%c0_10, %c0_11, %c1_12, %c0_13], %5 {strides = array<i32>} : memref<1x18x18x128xf32, #tpu.memory_space<vmem>>, vector<1x1x16x128xf32>,
    %c0_i32_14 = arith.constant 0 : i32
    %7 = arith.cmpi slt, %arg2, %c0_i32_14 : i32
    %c0_15 = arith.constant 0 : index
    %c0_16 = arith.constant 0 : index
    %c0_17 = arith.constant 0 : index
    %c0_18 = arith.constant 0 : index
    %8 = vector.load %arg5[%c0_15, %c0_16, %c0_17, %c0_18] : memref<1x1x16x128xf32, #tpu.memory_space<vmem>>, vector<1x1x16x128xf32>
    %9 = arith.select %7, %8, %2 : vector<1x1x16x128xf32>
    %c0_19 = arith.constant 0 : index
    %c17 = arith.constant 17 : index
    %c1_20 = arith.constant 1 : index
    %c0_21 = arith.constant 0 : index
    %10 = vector.load %arg9[%c0_19, %c17, %c1_20, %c0_21] : memref<1x18x18x128xf32, #tpu.memory_space<vmem>>, vector<1x1x16x128xf32>
    tpu.vector_store %arg9[%c0_19, %c17, %c1_20, %c0_21], %9 {strides = array<i32>} : memref<1x18x18x128xf32, #tpu.memory_space<vmem>>, vector<1x1x16x128xf32>,
    %cst_22 = arith.constant 0.000000e+00 : f32
    %11 = vector.broadcast %cst_22 : f32 to vector<1x18x1x128xf32>
    %c0_23 = arith.constant 0 : index
    %c0_24 = arith.constant 0 : index
    %c0_25 = arith.constant 0 : index
    %c0_26 = arith.constant 0 : index
    %12 = vector.load %arg9[%c0_23, %c0_24, %c0_25, %c0_26] : memref<1x18x18x128xf32, #tpu.memory_space<vmem>>, vector<1x18x1x128xf32>
    tpu.vector_store %arg9[%c0_23, %c0_24, %c0_25, %c0_26], %11 {strides = array<i32>} : memref<1x18x18x128xf32, #tpu.memory_space<vmem>>, vector<1x18x1x128xf32>,
    %c0_27 = arith.constant 0 : index
    %c0_28 = arith.constant 0 : index
    %c17_29 = arith.constant 17 : index
    %c0_30 = arith.constant 0 : index
    %13 = vector.load %arg9[%c0_27, %c0_28, %c17_29, %c0_30] : memref<1x18x18x128xf32, #tpu.memory_space<vmem>>, vector<1x18x1x128xf32>
    tpu.vector_store %arg9[%c0_27, %c0_28, %c17_29, %c0_30], %11 {strides = array<i32>} : memref<1x18x18x128xf32, #tpu.memory_space<vmem>>, vector<1x18x1x128xf32>,
    %c0_31 = arith.constant 0 : index
    %c0_32 = arith.constant 0 : index
    %c0_33 = arith.constant 0 : index
    %c0_34 = arith.constant 0 : index
    %14 = vector.load %arg7[%c0_31, %c0_32, %c0_33, %c0_34] : memref<1x1x1x128xf32, #tpu.memory_space<vmem>>, vector<1x1x1x128xf32>
    %15 = vector.shape_cast %14 : vector<1x1x1x128xf32> to vector<1x1x1x128xf32>
    %16 = vector.broadcast %15 : vector<1x1x1x128xf32> to vector<1x16x16x128xf32>
    %c0_35 = arith.constant 0 : index
    %c0_36 = arith.constant 0 : index
    %c0_37 = arith.constant 0 : index
    %c0_38 = arith.constant 0 : index
    %17 = vector.load %arg9[%c0_35, %c0_36, %c0_37, %c0_38] : memref<1x18x18x128xf32, #tpu.memory_space<vmem>>, vector<1x16x16x128xf32>
    %c0_39 = arith.constant 0 : index
    %c0_40 = arith.constant 0 : index
    %c0_41 = arith.constant 0 : index
    %18 = vector.load %arg6[%c0_39, %c0_40, %c0_41] : memref<3x3x128xf32, #tpu.memory_space<vmem>>, vector<1x1x128xf32>
    %19 = vector.shape_cast %18 : vector<1x1x128xf32> to vector<128xf32>
    %20 = vector.shape_cast %19 : vector<128xf32> to vector<1x1x1x128xf32>
    %21 = vector.broadcast %20 : vector<1x1x1x128xf32> to vector<1x16x16x128xf32>
    %22 = arith.mulf %17, %21 : vector<1x16x16x128xf32>
    %23 = arith.addf %16, %22 : vector<1x16x16x128xf32>
    %c0_42 = arith.constant 0 : index
    %c0_43 = arith.constant 0 : index
    %c1_44 = arith.constant 1 : index
    %c0_45 = arith.constant 0 : index
    %24 = vector.load %arg9[%c0_42, %c0_43, %c1_44, %c0_45] : memref<1x18x18x128xf32, #tpu.memory_space<vmem>>, vector<1x16x16x128xf32>
    %c0_46 = arith.constant 0 : index
    %c1_47 = arith.constant 1 : index
    %c0_48 = arith.constant 0 : index
    %25 = vector.load %arg6[%c0_46, %c1_47, %c0_48] : memref<3x3x128xf32, #tpu.memory_space<vmem>>, vector<1x1x128xf32>
    %26 = vector.shape_cast %25 : vector<1x1x128xf32> to vector<128xf32>
    %27 = vector.shape_cast %26 : vector<128xf32> to vector<1x1x1x128xf32>
    %28 = vector.broadcast %27 : vector<1x1x1x128xf32> to vector<1x16x16x128xf32>
    %29 = arith.mulf %24, %28 : vector<1x16x16x128xf32>
    %30 = arith.addf %23, %29 : vector<1x16x16x128xf32>
    %c0_49 = arith.constant 0 : index
    %c0_50 = arith.constant 0 : index
    %c2 = arith.constant 2 : index
    %c0_51 = arith.constant 0 : index
    %31 = vector.load %arg9[%c0_49, %c0_50, %c2, %c0_51] : memref<1x18x18x128xf32, #tpu.memory_space<vmem>>, vector<1x16x16x128xf32>
    %c0_52 = arith.constant 0 : index
    %c2_53 = arith.constant 2 : index
    %c0_54 = arith.constant 0 : index
    %32 = vector.load %arg6[%c0_52, %c2_53, %c0_54] : memref<3x3x128xf32, #tpu.memory_space<vmem>>, vector<1x1x128xf32>
    %33 = vector.shape_cast %32 : vector<1x1x128xf32> to vector<128xf32>
    %34 = vector.shape_cast %33 : vector<128xf32> to vector<1x1x1x128xf32>
    %35 = vector.broadcast %34 : vector<1x1x1x128xf32> to vector<1x16x16x128xf32>
    %36 = arith.mulf %31, %35 : vector<1x16x16x128xf32>
    %37 = arith.addf %30, %36 : vector<1x16x16x128xf32>
    %c0_55 = arith.constant 0 : index
    %c1_56 = arith.constant 1 : index
    %c0_57 = arith.constant 0 : index
    %c0_58 = arith.constant 0 : index
    %38 = vector.load %arg9[%c0_55, %c1_56, %c0_57, %c0_58] : memref<1x18x18x128xf32, #tpu.memory_space<vmem>>, vector<1x16x16x128xf32>
    %c1_59 = arith.constant 1 : index
    %c0_60 = arith.constant 0 : index
    %c0_61 = arith.constant 0 : index
    %39 = vector.load %arg6[%c1_59, %c0_60, %c0_61] : memref<3x3x128xf32, #tpu.memory_space<vmem>>, vector<1x1x128xf32>
    %40 = vector.shape_cast %39 : vector<1x1x128xf32> to vector<128xf32>
    %41 = vector.shape_cast %40 : vector<128xf32> to vector<1x1x1x128xf32>
    %42 = vector.broadcast %41 : vector<1x1x1x128xf32> to vector<1x16x16x128xf32>
    %43 = arith.mulf %38, %42 : vector<1x16x16x128xf32>
    %44 = arith.addf %37, %43 : vector<1x16x16x128xf32>
    %c0_62 = arith.constant 0 : index
    %c1_63 = arith.constant 1 : index
    %c1_64 = arith.constant 1 : index
    %c0_65 = arith.constant 0 : index
    %45 = vector.load %arg9[%c0_62, %c1_63, %c1_64, %c0_65] : memref<1x18x18x128xf32, #tpu.memory_space<vmem>>, vector<1x16x16x128xf32>
    %c1_66 = arith.constant 1 : index
    %c1_67 = arith.constant 1 : index
    %c0_68 = arith.constant 0 : index
    %46 = vector.load %arg6[%c1_66, %c1_67, %c0_68] : memref<3x3x128xf32, #tpu.memory_space<vmem>>, vector<1x1x128xf32>
    %47 = vector.shape_cast %46 : vector<1x1x128xf32> to vector<128xf32>
    %48 = vector.shape_cast %47 : vector<128xf32> to vector<1x1x1x128xf32>
    %49 = vector.broadcast %48 : vector<1x1x1x128xf32> to vector<1x16x16x128xf32>
    %50 = arith.mulf %45, %49 : vector<1x16x16x128xf32>
    %51 = arith.addf %44, %50 : vector<1x16x16x128xf32>
    %c0_69 = arith.constant 0 : index
    %c1_70 = arith.constant 1 : index
    %c2_71 = arith.constant 2 : index
    %c0_72 = arith.constant 0 : index
    %52 = vector.load %arg9[%c0_69, %c1_70, %c2_71, %c0_72] : memref<1x18x18x128xf32, #tpu.memory_space<vmem>>, vector<1x16x16x128xf32>
    %c1_73 = arith.constant 1 : index
    %c2_74 = arith.constant 2 : index
    %c0_75 = arith.constant 0 : index
    %53 = vector.load %arg6[%c1_73, %c2_74, %c0_75] : memref<3x3x128xf32, #tpu.memory_space<vmem>>, vector<1x1x128xf32>
    %54 = vector.shape_cast %53 : vector<1x1x128xf32> to vector<128xf32>
    %55 = vector.shape_cast %54 : vector<128xf32> to vector<1x1x1x128xf32>
    %56 = vector.broadcast %55 : vector<1x1x1x128xf32> to vector<1x16x16x128xf32>
    %57 = arith.mulf %52, %56 : vector<1x16x16x128xf32>
    %58 = arith.addf %51, %57 : vector<1x16x16x128xf32>
    %c0_76 = arith.constant 0 : index
    %c2_77 = arith.constant 2 : index
    %c0_78 = arith.constant 0 : index
    %c0_79 = arith.constant 0 : index
    %59 = vector.load %arg9[%c0_76, %c2_77, %c0_78, %c0_79] : memref<1x18x18x128xf32, #tpu.memory_space<vmem>>, vector<1x16x16x128xf32>
    %c2_80 = arith.constant 2 : index
    %c0_81 = arith.constant 0 : index
    %c0_82 = arith.constant 0 : index
    %60 = vector.load %arg6[%c2_80, %c0_81, %c0_82] : memref<3x3x128xf32, #tpu.memory_space<vmem>>, vector<1x1x128xf32>
    %61 = vector.shape_cast %60 : vector<1x1x128xf32> to vector<128xf32>
    %62 = vector.shape_cast %61 : vector<128xf32> to vector<1x1x1x128xf32>
    %63 = vector.broadcast %62 : vector<1x1x1x128xf32> to vector<1x16x16x128xf32>
    %64 = arith.mulf %59, %63 : vector<1x16x16x128xf32>
    %65 = arith.addf %58, %64 : vector<1x16x16x128xf32>
    %c0_83 = arith.constant 0 : index
    %c2_84 = arith.constant 2 : index
    %c1_85 = arith.constant 1 : index
    %c0_86 = arith.constant 0 : index
    %66 = vector.load %arg9[%c0_83, %c2_84, %c1_85, %c0_86] : memref<1x18x18x128xf32, #tpu.memory_space<vmem>>, vector<1x16x16x128xf32>
    %c2_87 = arith.constant 2 : index
    %c1_88 = arith.constant 1 : index
    %c0_89 = arith.constant 0 : index
    %67 = vector.load %arg6[%c2_87, %c1_88, %c0_89] : memref<3x3x128xf32, #tpu.memory_space<vmem>>, vector<1x1x128xf32>
    %68 = vector.shape_cast %67 : vector<1x1x128xf32> to vector<128xf32>
    %69 = vector.shape_cast %68 : vector<128xf32> to vector<1x1x1x128xf32>
    %70 = vector.broadcast %69 : vector<1x1x1x128xf32> to vector<1x16x16x128xf32>
    %71 = arith.mulf %66, %70 : vector<1x16x16x128xf32>
    %72 = arith.addf %65, %71 : vector<1x16x16x128xf32>
    %c0_90 = arith.constant 0 : index
    %c2_91 = arith.constant 2 : index
    %c2_92 = arith.constant 2 : index
    %c0_93 = arith.constant 0 : index
    %73 = vector.load %arg9[%c0_90, %c2_91, %c2_92, %c0_93] : memref<1x18x18x128xf32, #tpu.memory_space<vmem>>, vector<1x16x16x128xf32>
    %c2_94 = arith.constant 2 : index
    %c2_95 = arith.constant 2 : index
    %c0_96 = arith.constant 0 : index
    %74 = vector.load %arg6[%c2_94, %c2_95, %c0_96] : memref<3x3x128xf32, #tpu.memory_space<vmem>>, vector<1x1x128xf32>
    %75 = vector.shape_cast %74 : vector<1x1x128xf32> to vector<128xf32>
    %76 = vector.shape_cast %75 : vector<128xf32> to vector<1x1x1x128xf32>
    %77 = vector.broadcast %76 : vector<1x1x1x128xf32> to vector<1x16x16x128xf32>
    %78 = arith.mulf %73, %77 : vector<1x16x16x128xf32>
    %79 = arith.addf %72, %78 : vector<1x16x16x128xf32>
    %c0_97 = arith.constant 0 : index
    %c0_98 = arith.constant 0 : index
    %c0_99 = arith.constant 0 : index
    %c0_100 = arith.constant 0 : index
    %80 = vector.load %arg8[%c0_97, %c0_98, %c0_99, %c0_100] : memref<1x16x16x128xf32, #tpu.memory_space<vmem>>, vector<1x16x16x128xf32>
    tpu.vector_store %arg8[%c0_97, %c0_98, %c0_99, %c0_100], %79 {strides = array<i32>} : memref<1x16x16x128xf32, #tpu.memory_space<vmem>>, vector<1x16x16x128xf32>,
    return
  }
  func.func @transform_0(%arg0: i32, %arg1: i32, %arg2: i32) -> (i32, i32, i32, i32) {
    %c0_i32 = arith.constant 0 : i32
    %c0_i32_0 = arith.constant 0 : i32
    return %arg0, %arg2, %c0_i32, %arg1 : i32, i32, i32, i32
  }
  func.func @transform_1(%arg0: i32, %arg1: i32, %arg2: i32) -> (i32, i32, i32, i32) {
    %c16_i32 = arith.constant 16 : i32
    %0 = arith.muli %arg2, %c16_i32 : i32
    %c1_i32 = arith.constant 1 : i32
    %1 = arith.subi %0, %c1_i32 : i32
    %c0_i32 = arith.constant 0 : i32
    %2 = arith.maxsi %1, %c0_i32 : i32
    %c0_i32_0 = arith.constant 0 : i32
    %c0_i32_1 = arith.constant 0 : i32
    return %arg0, %2, %c0_i32_0, %arg1 : i32, i32, i32, i32
  }
  func.func @transform_2(%arg0: i32, %arg1: i32, %arg2: i32) -> (i32, i32, i32, i32) {
    %c16_i32 = arith.constant 16 : i32
    %0 = arith.muli %arg2, %c16_i32 : i32
    %c16_i32_0 = arith.constant 16 : i32
    %1 = arith.addi %0, %c16_i32_0 : i32
    %c15_i32 = arith.constant 15 : i32
    %2 = arith.minsi %1, %c15_i32 : i32
    %c0_i32 = arith.constant 0 : i32
    %c0_i32_1 = arith.constant 0 : i32
    return %arg0, %2, %c0_i32, %arg1 : i32, i32, i32, i32
  }
  func.func @transform_3(%arg0: i32, %arg1: i32, %arg2: i32) -> (i32, i32, i32) {
    %c0_i32 = arith.constant 0 : i32
    %c0_i32_0 = arith.constant 0 : i32
    %c0_i32_1 = arith.constant 0 : i32
    return %c0_i32, %c0_i32_0, %arg1 : i32, i32, i32
  }
  func.func @transform_4(%arg0: i32, %arg1: i32, %arg2: i32) -> (i32, i32, i32, i32) {
    %c0_i32 = arith.constant 0 : i32
    %c0_i32_0 = arith.constant 0 : i32
    %c0_i32_1 = arith.constant 0 : i32
    %c0_i32_2 = arith.constant 0 : i32
    return %c0_i32, %c0_i32_0, %c0_i32_1, %arg1 : i32, i32, i32, i32
  }
  func.func @transform_5(%arg0: i32, %arg1: i32, %arg2: i32) -> (i32, i32, i32, i32) {
    %c0_i32 = arith.constant 0 : i32
    %c0_i32_0 = arith.constant 0 : i32
    return %arg0, %arg2, %c0_i32, %arg1 : i32, i32, i32, i32
  }
}

</mosaic_0001>

<llo_original>
// kernel: tpu_custom_call.1
$region0: #{tpu_custom_call.1}
  #allocation0 [shape = 'u32[]', space=smem, size = 0x4, offset = 0x4, fixed_abs, tag = 'smem constant byte address 0x4 - core index']
  #allocation1 [shape = 'u32[144,128]{1,0:T(1,128)}', space=vmem, size = 0x12000, scoped, tag = 'internal scratch']
  #allocation2 [shape = 'f32[1,18,18,128]{3,2,1,0:T(8,128)}', space=vmem, size = 0x36000, scoped, tag = 'scratch operand']
  %s0 = inlined_call_operand.hbm [shape: f32[2,16,16,128], index: 0, kind: input, shape index: {}]
  %s1 = inlined_call_operand.hbm [shape: f32[2,16,16,128], index: 1, kind: input, shape index: {}]
  %s2 = inlined_call_operand.hbm [shape: f32[2,16,16,128], index: 2, kind: input, shape index: {}]
  %s3 = inlined_call_operand.hbm [shape: f32[3,3,128], index: 3, kind: input, shape index: {}]
  %s4 = inlined_call_operand.vmem [shape: f32[1,1,1,128], index: 4, kind: input, shape index: {}]
  %s5 = inlined_call_operand.hbm [shape: f32[2,16,16,128], index: 5, kind: output, shape index: {}]
  %s6 = sld [smem:[#allocation0]]
  $region69: #{tpu_custom_call.1} parent=0
    _
  %s8 = ssub.s32 1, %s6
  %s9 = scalar_select 0, %s8, %s6
  $region1: #{tpu_custom_call.1} parent=0
    #allocation3 [shape = 'u8[262144]{0}', space=vmem, size = 0x40000, scoped, tag = 'input window, operand 0']
    #allocation4 [shape = 's32[2]{0}', space=sflag, size = 0x8, scoped, tag = 'scoped memory for tpu_custom_call.1']
    #allocation5 [shape = 's32[2]{0}', space=sflag, size = 0x8, scoped, tag = 'scoped memory for tpu_custom_call.1']
    #allocation6 [shape = 'u8[16384]{0}', space=vmem, size = 0x4000, scoped, tag = 'input window, operand 1']
    #allocation7 [shape = 's32[2]{0}', space=sflag, size = 0x8, scoped, tag = 'scoped memory for tpu_custom_call.1']
    #allocation8 [shape = 'u8[16384]{0}', space=vmem, size = 0x4000, scoped, tag = 'input window, operand 2']
    #allocation9 [shape = 'u8[6144]{0}', space=vmem, size = 0x1800, scoped, tag = 'input window, operand 3, single buffered']
    #allocation10 [shape = 's32[1]{0}', space=sflag, size = 0x4, scoped, tag = 'scoped memory for tpu_custom_call.1']
    #allocation11 [shape = 'u8[262144]{0}', space=vmem, size = 0x40000, scoped, tag = 'output window, operand 0']
    %10 = vsyncpa [#allocation4], 0
    %s11 = scalar_lea.sflag [#allocation4], 1
    %12 = vsyncpa %s11, 0
    %13 = vsyncpa [#allocation7], 0
    %s14 = scalar_lea.sflag [#allocation7], 1
    %15 = vsyncpa %s14, 0
    %16 = vsyncpa [#allocation10], 0
    %17 = vsyncpa [#allocation5], 0
    %s18 = scalar_lea.sflag [#allocation5], 1
    %19 = vsyncpa %s18, 0
    loop: start=0, step=1, limit=4
    $region2: #{tpu_custom_call.1} parent=1 // loop_pre_header
      _
    $region3: #{tpu_custom_call.1} parent=1 // loop_header
      %s21 = sphi 0, %s25
      %p22 = scmp.ge.s32.totalorder %s21, 4
      %s28 = sphi 0, %s47
      %s29 = sphi 0, %s43
      %s30 = sphi 0, %s39
      %s31 = sphi 0, %s28
      %s32 = sphi 0, %s29
      %s33 = sphi 0, %s30
      %s34 = sphi 0, %s31
      %s35 = sphi 0, %s32
      %s36 = sphi 0, %s33
      %s54 = sphi 0, %s56
      %s57 = sphi 0, %s54
      %s58 = sphi 0, %s57
      %s74 = sphi 0, %s58
      %s92 = sphi 0, %s94
      %s95 = sphi 0, %s92
      %s96 = sphi 0, %s95
      %s112 = sphi 0, %s96
      %s130 = sphi 0, %s132
      %s133 = sphi 0, %s130
      %s134 = sphi 0, %s133
      %s150 = sphi 0, %s134
      %s156 = sphi 0, %s158
      %s159 = sphi 0, %s156
      %s160 = sphi 0, %s159
      %s176 = sphi 0, %s160
      %s182 = sphi 0, %s184
      %s185 = sphi 0, %s182
      %s186 = sphi 0, %s185
      %s202 = sphi 0, %s186
      %s212 = sphi 0, %s214
      %s215 = sphi 0, %s212
      %s216 = sphi 0, %s215
      %s232 = sphi 0, %s216
    $region4: #{tpu_custom_call.1} parent=1 // loop_header_branch
      %24 = sbr.rel (%p22) target = $region8
    $region5: #{tpu_custom_call.1} parent=1 // loop_body
      %s26 = ssub.s32 %s21, 1
      %s27 = ssub.s32 %s21, 2
      %s37 = sadd.s32 1, %s30
      %p38 = scmp.ge.s32.totalorder %s37, 1
      %s39 = scalar_select %p38, 0, %s37
      %s40 = sadd.s32 1, %s29
      %s41 = scalar_select %p38, %s40, %s29
      %p42 = scmp.ge.s32.totalorder %s41, 1
      %s43 = scalar_select %p42, 0, %s41
      %s44 = sadd.s32 1, %s28
      %s45 = scalar_select %p42, %s44, %s28
      %p46 = scmp.ge.s32.totalorder %s45, 2
      %s47 = scalar_select %p46, 0, %s45
      %s48 = ssub.s32 %s28, %s47
      %s49 = ssub.s32 %s30, %s39
      %s50 = sor.u32 %s48, %s49
      %s51 = ssub.s32 %s29, %s43
      %s52 = sor.u32 %s50, %s51
      %p53 = scmp.eq.s32.totalorder %s52, 0
      %s55 = sadd.s32 %s54, 1
      %s56 = scalar_select %p53, %s54, %s55
      %p59 = pneg %p53
      %p60 = scmp.eq.s32.totalorder %s21, 1
      %p61 = por %p59, %p60
      %p62 = scmp.ne.s32.totalorder %s54, %s57
      %p63 = scmp.eq.s32.totalorder %s21, 0
      %p64 = por %p62, %p63
      %p65 = scmp.ne.s32.totalorder %s54, %s57
      %p66 = scmp.eq.s32.totalorder %s26, 1
      %p67 = por %p65, %p66
      %p68 = scmp.ne.s32.totalorder %s57, %s58
      %p69 = scmp.eq.s32.totalorder %s26, 0
      %p70 = por %p68, %p69
      %p71 = scmp.ne.s32.totalorder %s57, %s58
      %p72 = scmp.eq.s32.totalorder %s27, 1
      %p73 = por %p71, %p72
      %p75 = scmp.ne.s32.totalorder %s58, %s74
      %p76 = scmp.eq.s32.totalorder %s27, 0
      %p77 = por %p75, %p76
      %s78 = smul.u32 %s30, 16
      %s79 = ssub.s32 %s78, 1
      %p80 = scmp.gt.s32.totalorder %s79, 0
      %s81 = scalar_select %p80, %s79, 0
      %s82 = smul.u32 %s39, 16
      %s83 = ssub.s32 %s82, 1
      %p84 = scmp.gt.s32.totalorder %s83, 0
      %s85 = scalar_select %p84, %s83, 0
      %s86 = ssub.s32 %s28, %s47
      %s87 = ssub.s32 %s81, %s85
      %s88 = sor.u32 %s86, %s87
      %s89 = ssub.s32 %s29, %s43
      %s90 = sor.u32 %s88, %s89
      %p91 = scmp.eq.s32.totalorder %s90, 0
      %s93 = sadd.s32 %s92, 1
      %s94 = scalar_select %p91, %s92, %s93
      %p97 = pneg %p91
      %p98 = scmp.eq.s32.totalorder %s21, 1
      %p99 = por %p97, %p98
      %p100 = scmp.ne.s32.totalorder %s92, %s95
      %p101 = scmp.eq.s32.totalorder %s21, 0
      %p102 = por %p100, %p101
      %p103 = scmp.ne.s32.totalorder %s92, %s95
      %p104 = scmp.eq.s32.totalorder %s26, 1
      %p105 = por %p103, %p104
      %p106 = scmp.ne.s32.totalorder %s95, %s96
      %p107 = scmp.eq.s32.totalorder %s26, 0
      %p108 = por %p106, %p107
      %p109 = scmp.ne.s32.totalorder %s95, %s96
      %p110 = scmp.eq.s32.totalorder %s27, 1
      %p111 = por %p109, %p110
      %p113 = scmp.ne.s32.totalorder %s96, %s112
      %p114 = scmp.eq.s32.totalorder %s27, 0
      %p115 = por %p113, %p114
      %s116 = smul.u32 %s30, 16
      %s117 = sadd.s32 %s116, 16
      %p118 = scmp.lt.s32.totalorder %s117, 15
      %s119 = scalar_select %p118, %s117, 15
      %s120 = smul.u32 %s39, 16
      %s121 = sadd.s32 %s120, 16
      %p122 = scmp.lt.s32.totalorder %s121, 15
      %s123 = scalar_select %p122, %s121, 15
      %s124 = ssub.s32 %s28, %s47
      %s125 = ssub.s32 %s119, %s123
      %s126 = sor.u32 %s124, %s125
      %s127 = ssub.s32 %s29, %s43
      %s128 = sor.u32 %s126, %s127
      %p129 = scmp.eq.s32.totalorder %s128, 0
      %s131 = sadd.s32 %s130, 1
      %s132 = scalar_select %p129, %s130, %s131
      %p135 = pneg %p129
      %p136 = scmp.eq.s32.totalorder %s21, 1
      %p137 = por %p135, %p136
      %p138 = scmp.ne.s32.totalorder %s130, %s133
      %p139 = scmp.eq.s32.totalorder %s21, 0
      %p140 = por %p138, %p139
      %p141 = scmp.ne.s32.totalorder %s130, %s133
      %p142 = scmp.eq.s32.totalorder %s26, 1
      %p143 = por %p141, %p142
      %p144 = scmp.ne.s32.totalorder %s133, %s134
      %p145 = scmp.eq.s32.totalorder %s26, 0
      %p146 = por %p144, %p145
      %p147 = scmp.ne.s32.totalorder %s133, %s134
      %p148 = scmp.eq.s32.totalorder %s27, 1
      %p149 = por %p147, %p148
      %p151 = scmp.ne.s32.totalorder %s134, %s150
      %p152 = scmp.eq.s32.totalorder %s27, 0
      %p153 = por %p151, %p152
      %s154 = ssub.s32 %s29, %s43
      %p155 = scmp.eq.s32.totalorder %s154, 0
      %s157 = sadd.s32 %s156, 1
      %s158 = scalar_select %p155, %s156, %s157
      %p161 = pneg %p155
      %p162 = scmp.eq.s32.totalorder %s21, 1
      %p163 = por %p161, %p162
      %p164 = scmp.ne.s32.totalorder %s156, %s159
      %p165 = scmp.eq.s32.totalorder %s21, 0
      %p166 = por %p164, %p165
      %p167 = scmp.ne.s32.totalorder %s156, %s159
      %p168 = scmp.eq.s32.totalorder %s26, 1
      %p169 = por %p167, %p168
      %p170 = scmp.ne.s32.totalorder %s159, %s160
      %p171 = scmp.eq.s32.totalorder %s26, 0
      %p172 = por %p170, %p171
      %p173 = scmp.ne.s32.totalorder %s159, %s160
      %p174 = scmp.eq.s32.totalorder %s27, 1
      %p175 = por %p173, %p174
      %p177 = scmp.ne.s32.totalorder %s160, %s176
      %p178 = scmp.eq.s32.totalorder %s27, 0
      %p179 = por %p177, %p178
      %s180 = ssub.s32 %s29, %s43
      %p181 = scmp.eq.s32.totalorder %s180, 0
      %s183 = sadd.s32 %s182, 1
      %s184 = scalar_select %p181, %s182, %s183
      %p187 = pneg %p181
      %p188 = scmp.eq.s32.totalorder %s21, 1
      %p189 = por %p187, %p188
      %p190 = scmp.ne.s32.totalorder %s182, %s185
      %p191 = scmp.eq.s32.totalorder %s21, 0
      %p192 = por %p190, %p191
      %p193 = scmp.ne.s32.totalorder %s182, %s185
      %p194 = scmp.eq.s32.totalorder %s26, 1
      %p195 = por %p193, %p194
      %p196 = scmp.ne.s32.totalorder %s185, %s186
      %p197 = scmp.eq.s32.totalorder %s26, 0
      %p198 = por %p196, %p197
      %p199 = scmp.ne.s32.totalorder %s185, %s186
      %p200 = scmp.eq.s32.totalorder %s27, 1
      %p201 = por %p199, %p200
      %p203 = scmp.ne.s32.totalorder %s186, %s202
      %p204 = scmp.eq.s32.totalorder %s27, 0
      %p205 = por %p203, %p204
      %s206 = ssub.s32 %s28, %s47
      %s207 = ssub.s32 %s30, %s39
      %s208 = sor.u32 %s206, %s207
      %s209 = ssub.s32 %s29, %s43
      %s210 = sor.u32 %s208, %s209
      %p211 = scmp.eq.s32.totalorder %s210, 0
      %s213 = sadd.s32 %s212, 1
      %s214 = scalar_select %p211, %s212, %s213
      %p217 = pneg %p211
      %p218 = scmp.eq.s32.totalorder %s21, 1
      %p219 = por %p217, %p218
      %p220 = scmp.ne.s32.totalorder %s212, %s215
      %p221 = scmp.eq.s32.totalorder %s21, 0
      %p222 = por %p220, %p221
      %p223 = scmp.ne.s32.totalorder %s212, %s215
      %p224 = scmp.eq.s32.totalorder %s26, 1
      %p225 = por %p223, %p224
      %p226 = scmp.ne.s32.totalorder %s215, %s216
      %p227 = scmp.eq.s32.totalorder %s26, 0
      %p228 = por %p226, %p227
      %p229 = scmp.ne.s32.totalorder %s215, %s216
      %p230 = scmp.eq.s32.totalorder %s27, 1
      %p231 = por %p229, %p230
      %p233 = scmp.ne.s32.totalorder %s216, %s232
      %p234 = scmp.eq.s32.totalorder %s27, 0
      %p235 = por %p233, %p234
      %p236 = scmp.le.s32.totalorder 1, %s21
      %p237 = scmp.lt.s32.totalorder %s21, 3
      %p238 = pnand %p236, %p237
      %p239 = pneg %p238
      // Predicated region
      $region9: #{tpu_custom_call.1} parent=5 // pred_check
        _
      $region10: #{tpu_custom_call.1} parent=5 // pred_check_branch
        %241 = sbr.rel (%p238) target = $region12
      $region11: #{tpu_custom_call.1} parent=5 // pred_region
        %s242 = ssub.s32 %s21, 1
        // Predicated region
        $region13: #{tpu_custom_call.1} parent=11 // pred_check
          %p243 = pneg %p172
        $region14: #{tpu_custom_call.1} parent=11 // pred_check_branch
          %245 = sbr.rel (%p243) target = $region16
        $region15: #{tpu_custom_call.1} parent=11 // pred_region
          %s247 = ssub.s32 192, 192
          %248 = vsyncadd [#allocation10], %s247
          %s249 = smul.addr %s32, 64
          %s250 = scalar_lea.hbm %s3, %s249
          %s251 = sshll.u32 [#allocation9], 4
          %s252 = int_to_ptr.vmem [resolvable:$true] %s251
          %257 = dma.hbm_to_vmem [thread:$0]  %s250, 192, %s252, [#allocation10], 64, 64, 4
        $region16: #{tpu_custom_call.1} parent=11 // pred_fallthru
          _
        // Predicated region
        $region17: #{tpu_custom_call.1} parent=11 // pred_check
          %p258 = pneg %p198
        $region18: #{tpu_custom_call.1} parent=11 // pred_check_branch
          %260 = sbr.rel (%p258) target = $region20
        $region19: #{tpu_custom_call.1} parent=11 // pred_region
          %p261 = scmp.lt.s32.totalorder %s32, 0
          %s262 = scalar_select %p261, %s32, 0
          %s263 = scalar_lea.vmem %s4, %s262
        $region20: #{tpu_custom_call.1} parent=11 // pred_fallthru
          _
      $region12: #{tpu_custom_call.1} parent=5 // pred_fallthru
        _
      %p264 = scmp.lt.s32.totalorder %s21, 2
      // Predicated region
      $region21: #{tpu_custom_call.1} parent=5 // pred_check
        %p265 = pneg %p264
      $region22: #{tpu_custom_call.1} parent=5 // pred_check_branch
        %267 = sbr.rel (%p265) target = $region24
      $region23: #{tpu_custom_call.1} parent=5 // pred_region
        // Predicated region
        $region25: #{tpu_custom_call.1} parent=23 // pred_check
          %p268 = pneg %p64
        $region26: #{tpu_custom_call.1} parent=23 // pred_check_branch
          %270 = sbr.rel (%p268) target = $region28
        $region27: #{tpu_custom_call.1} parent=23 // pred_region
          %s271 = sand.u32 %s54, 1
          %s272 = scalar_lea.sflag [#allocation4], %s271
          %s273 = sand.u32 %s54, 1
          %s274 = smul.addr %s273, 256
          %s275 = scalar_lea.vmem [#allocation3], %s274
          %s276 = smul.u32 16, %s30
          %s278 = ssub.s32 4096, 4096
          %279 = vsyncadd %s272, %s278
          %s280 = smul.addr %s276, 2
          %s281 = sadd.s32 %s29, %s280
          %s282 = smul.addr %s28, 32
          %s283 = sadd.s32 %s281, %s282
          %s284 = smul.addr %s283, 128
          %s285 = scalar_lea.hbm %s0, %s284
          %s286 = sshll.u32 %s275, 4
          %s287 = int_to_ptr.vmem [resolvable:$true] %s286
          %292 = dma.hbm_to_vmem [thread:$0]  %s285, 4096, %s287, %s272, 128, 128, 8
        $region28: #{tpu_custom_call.1} parent=23 // pred_fallthru
          _
        // Predicated region
        $region29: #{tpu_custom_call.1} parent=23 // pred_check
          %p293 = pneg %p102
        $region30: #{tpu_custom_call.1} parent=23 // pred_check_branch
          %295 = sbr.rel (%p293) target = $region32
        $region31: #{tpu_custom_call.1} parent=23 // pred_region
          %s296 = sand.u32 %s21, 1
          %s297 = scalar_lea.sflag [#allocation7], %s296
          %s298 = sand.u32 %s92, 1
          %s299 = smul.addr %s298, 16
          %s300 = scalar_lea.vmem [#allocation6], %s299
          %s301 = smul.u32 %s30, 16
          %s302 = ssub.s32 %s301, 1
          %p303 = scmp.gt.s32.totalorder %s302, 0
          %s304 = scalar_select %p303, %s302, 0
          %s306 = ssub.s32 256, 256
          %307 = vsyncadd %s297, %s306
          %s308 = smul.addr %s304, 2
          %s309 = sadd.s32 %s29, %s308
          %s310 = smul.addr %s28, 32
          %s311 = sadd.s32 %s309, %s310
          %s312 = smul.addr %s311, 128
          %s313 = scalar_lea.hbm %s1, %s312
          %s314 = sshll.u32 %s300, 4
          %s315 = int_to_ptr.vmem [resolvable:$true] %s314
          %320 = dma.hbm_to_vmem [thread:$0]  %s313, 256, %s315, %s297, 128, 128, 8
        $region32: #{tpu_custom_call.1} parent=23 // pred_fallthru
          _
        // Predicated region
        $region33: #{tpu_custom_call.1} parent=23 // pred_check
          %p321 = pneg %p140
        $region34: #{tpu_custom_call.1} parent=23 // pred_check_branch
          %323 = sbr.rel (%p321) target = $region36
        $region35: #{tpu_custom_call.1} parent=23 // pred_region
          %s324 = sand.u32 %s21, 1
          %s325 = scalar_lea.sflag [#allocation7], %s324
          %s326 = sand.u32 %s130, 1
          %s327 = smul.addr %s326, 16
          %s328 = scalar_lea.vmem [#allocation8], %s327
          %s329 = smul.u32 %s30, 16
          %s330 = sadd.s32 %s329, 16
          %p331 = scmp.lt.s32.totalorder %s330, 15
          %s332 = scalar_select %p331, %s330, 15
          %s334 = ssub.s32 256, 256
          %335 = vsyncadd %s325, %s334
          %s336 = smul.addr %s332, 2
          %s337 = sadd.s32 %s29, %s336
          %s338 = smul.addr %s28, 32
          %s339 = sadd.s32 %s337, %s338
          %s340 = smul.addr %s339, 128
          %s341 = scalar_lea.hbm %s2, %s340
          %s342 = sshll.u32 %s328, 4
          %s343 = int_to_ptr.vmem [resolvable:$true] %s342
          %348 = dma.hbm_to_vmem [thread:$0]  %s341, 256, %s343, %s325, 128, 128, 8
        $region36: #{tpu_custom_call.1} parent=23 // pred_fallthru
          _
      $region24: #{tpu_custom_call.1} parent=5 // pred_fallthru
        _
      %p349 = scmp.le.s32.totalorder 1, %s21
      %p350 = scmp.lt.s32.totalorder %s21, 3
      %p351 = pnand %p349, %p350
      %p352 = pneg %p351
      // Predicated region
      $region37: #{tpu_custom_call.1} parent=5 // pred_check
        _
      $region38: #{tpu_custom_call.1} parent=5 // pred_check_branch
        %354 = sbr.rel (%p351) target = $region40
      $region39: #{tpu_custom_call.1} parent=5 // pred_region
        %s355 = ssub.s32 %s21, 1
        %s356 = sand.u32 %s57, 1
        %s357 = scalar_lea.sflag [#allocation4], %s356
        %s358 = sand.u32 %s57, 1
        %s359 = smul.addr %s358, 256
        %s360 = scalar_lea.vmem [#allocation3], %s359
        // Predicated region
        $region41: #{tpu_custom_call.1} parent=39 // pred_check
          %p361 = pneg %p70
        $region42: #{tpu_custom_call.1} parent=39 // pred_check_branch
          %363 = sbr.rel (%p361) target = $region44
        $region43: #{tpu_custom_call.1} parent=39 // pred_region
          %364 = dma.done %s357, 4096
        $region44: #{tpu_custom_call.1} parent=39 // pred_fallthru
          _
        %s365 = sand.u32 %s26, 1
        %s366 = scalar_lea.sflag [#allocation7], %s365
        %s367 = sand.u32 %s95, 1
        %s368 = smul.addr %s367, 16
        %s369 = scalar_lea.vmem [#allocation6], %s368
        // Predicated region
        $region45: #{tpu_custom_call.1} parent=39 // pred_check
          %p370 = pneg %p108
        $region46: #{tpu_custom_call.1} parent=39 // pred_check_branch
          %372 = sbr.rel (%p370) target = $region48
        $region47: #{tpu_custom_call.1} parent=39 // pred_region
          %373 = dma.done %s366, 256
        $region48: #{tpu_custom_call.1} parent=39 // pred_fallthru
          _
        %s374 = sand.u32 %s26, 1
        %s375 = scalar_lea.sflag [#allocation7], %s374
        %s376 = sand.u32 %s133, 1
        %s377 = smul.addr %s376, 16
        %s378 = scalar_lea.vmem [#allocation8], %s377
        // Predicated region
        $region49: #{tpu_custom_call.1} parent=39 // pred_check
          %p379 = pneg %p146
        $region50: #{tpu_custom_call.1} parent=39 // pred_check_branch
          %381 = sbr.rel (%p379) target = $region52
        $region51: #{tpu_custom_call.1} parent=39 // pred_region
          %382 = dma.done %s375, 256
        $region52: #{tpu_custom_call.1} parent=39 // pred_fallthru
          _
        // Predicated region
        $region53: #{tpu_custom_call.1} parent=39 // pred_check
          %p383 = pneg %p172
        $region54: #{tpu_custom_call.1} parent=39 // pred_check_branch
          %385 = sbr.rel (%p383) target = $region56
        $region55: #{tpu_custom_call.1} parent=39 // pred_region
          %386 = dma.done [#allocation10], 192
        $region56: #{tpu_custom_call.1} parent=39 // pred_fallthru
          _
        %s387 = sand.u32 %s57, 1
        %s388 = scalar_lea.sflag [#allocation4], %s387
        %s389 = sand.u32 %s57, 1
        %s390 = smul.addr %s389, 256
        %s391 = scalar_lea.vmem [#allocation3], %s390
        %p392 = pneg %p70
        %p393 = pneg %p67
        %s394 = sand.u32 %s26, 1
        %s395 = scalar_lea.sflag [#allocation7], %s394
        %s396 = sand.u32 %s95, 1
        %s397 = smul.addr %s396, 16
        %s398 = scalar_lea.vmem [#allocation6], %s397
        %p399 = pneg %p108
        %p400 = pneg %p105
        %s401 = sand.u32 %s26, 1
        %s402 = scalar_lea.sflag [#allocation7], %s401
        %s403 = sand.u32 %s133, 1
        %s404 = smul.addr %s403, 16
        %s405 = scalar_lea.vmem [#allocation8], %s404
        %p406 = pneg %p146
        %p407 = pneg %p143
        %p408 = pneg %p172
        %p409 = pneg %p169
        %p410 = scmp.lt.s32.totalorder %s32, 0
        %s411 = scalar_select %p410, %s32, 0
        %s412 = scalar_lea.vmem %s4, %s411
        %p413 = pneg %p198
        %p414 = pneg %p195
        %p415 = pneg %p228
        %p416 = pneg %p225
        %s417 = sand.u32 %s215, 1
        %s418 = scalar_lea.sflag [#allocation5], %s417
        %s419 = sand.u32 %s215, 1
        %s420 = smul.addr %s419, 256
        %s421 = scalar_lea.vmem [#allocation11], %s420
        %s422 = smul.u32 16, %s33
        %s423 = smul.u32 %s33, 16
        %s424 = ssub.s32 %s423, 1
        %p425 = scmp.gt.s32.totalorder %s424, 0
        %s426 = scalar_select %p425, %s424, 0
        %s427 = smul.u32 %s33, 16
        %s428 = sadd.s32 %s427, 16
        %p429 = scmp.lt.s32.totalorder %s428, 15
        %s430 = scalar_select %p429, %s428, 15
        %p431 = scmp.lt.s32.totalorder %s32, 0
        %s432 = scalar_select %p431, %s32, 0
        %s433 = scalar_lea.vmem %s4, %s432
        %s434 = smul.u32 16, %s33
        %v435 = vld [vmem:[%s360] sm:$0xff]
        %v436 = vld [vmem:[%s360 + $0x8] sm:$0xff]
        %v437 = vld [vmem:[%s360 + $0x10] sm:$0xff]
        %v438 = vld [vmem:[%s360 + $0x18] sm:$0xff]
        %v439 = vld [vmem:[%s360 + $0x20] sm:$0xff]
        %v440 = vld [vmem:[%s360 + $0x28] sm:$0xff]
        %v441 = vld [vmem:[%s360 + $0x30] sm:$0xff]
        %v442 = vld [vmem:[%s360 + $0x38] sm:$0xff]
        %v443 = vld [vmem:[%s360 + $0x40] sm:$0xff]
        %v444 = vld [vmem:[%s360 + $0x48] sm:$0xff]
        %v445 = vld [vmem:[%s360 + $0x50] sm:$0xff]
        %v446 = vld [vmem:[%s360 + $0x58] sm:$0xff]
        %v447 = vld [vmem:[%s360 + $0x60] sm:$0xff]
        %v448 = vld [vmem:[%s360 + $0x68] sm:$0xff]
        %v449 = vld [vmem:[%s360 + $0x70] sm:$0xff]
        %v450 = vld [vmem:[%s360 + $0x78] sm:$0xff]
        %v451 = vld [vmem:[%s360 + $0x80] sm:$0xff]
        %v452 = vld [vmem:[%s360 + $0x88] sm:$0xff]
        %v453 = vld [vmem:[%s360 + $0x90] sm:$0xff]
        %v454 = vld [vmem:[%s360 + $0x98] sm:$0xff]
        %v455 = vld [vmem:[%s360 + $0xa0] sm:$0xff]
        %v456 = vld [vmem:[%s360 + $0xa8] sm:$0xff]
        %v457 = vld [vmem:[%s360 + $0xb0] sm:$0xff]
        %v458 = vld [vmem:[%s360 + $0xb8] sm:$0xff]
        %v459 = vld [vmem:[%s360 + $0xc0] sm:$0xff]
        %v460 = vld [vmem:[%s360 + $0xc8] sm:$0xff]
        %v461 = vld [vmem:[%s360 + $0xd0] sm:$0xff]
        %v462 = vld [vmem:[%s360 + $0xd8] sm:$0xff]
        %v463 = vld [vmem:[%s360 + $0xe0] sm:$0xff]
        %v464 = vld [vmem:[%s360 + $0xe8] sm:$0xff]
        %v465 = vld [vmem:[%s360 + $0xf0] sm:$0xff]
        %v466 = vld [vmem:[%s360 + $0xf8] sm:$0xff]
        %s467 = scalar_lea.vmem [#allocation2], 24
        %468 = vst [vmem:[%s467 + $0x1] sm:$0xff] %v435
        %469 = vst [vmem:[%s467 + $0x9] sm:$0xff] %v436
        %470 = vst [vmem:[%s467 + $0x19] sm:$0xff] %v437
        %471 = vst [vmem:[%s467 + $0x21] sm:$0xff] %v438
        %472 = vst [vmem:[%s467 + $0x31] sm:$0xff] %v439
        %473 = vst [vmem:[%s467 + $0x39] sm:$0xff] %v440
        %474 = vst [vmem:[%s467 + $0x49] sm:$0xff] %v441
        %475 = vst [vmem:[%s467 + $0x51] sm:$0xff] %v442
        %476 = vst [vmem:[%s467 + $0x61] sm:$0xff] %v443
        %477 = vst [vmem:[%s467 + $0x69] sm:$0xff] %v444
        %478 = vst [vmem:[%s467 + $0x79] sm:$0xff] %v445
        %479 = vst [vmem:[%s467 + $0x81] sm:$0xff] %v446
        %480 = vst [vmem:[%s467 + $0x91] sm:$0xff] %v447
        %481 = vst [vmem:[%s467 + $0x99] sm:$0xff] %v448
        %482 = vst [vmem:[%s467 + $0xa9] sm:$0xff] %v449
        %483 = vst [vmem:[%s467 + $0xb1] sm:$0xff] %v450
        %484 = vst [vmem:[%s467 + $0xc1] sm:$0xff] %v451
        %485 = vst [vmem:[%s467 + $0xc9] sm:$0xff] %v452
        %486 = vst [vmem:[%s467 + $0xd9] sm:$0xff] %v453
        %487 = vst [vmem:[%s467 + $0xe1] sm:$0xff] %v454
        %488 = vst [vmem:[%s467 + $0xf1] sm:$0xff] %v455
        %489 = vst [vmem:[%s467 + $0xf9] sm:$0xff] %v456
        %490 = vst [vmem:[%s467 + $0x109] sm:$0xff] %v457
        %491 = vst [vmem:[%s467 + $0x111] sm:$0xff] %v458
        %492 = vst [vmem:[%s467 + $0x121] sm:$0xff] %v459
        %493 = vst [vmem:[%s467 + $0x129] sm:$0xff] %v460
        %494 = vst [vmem:[%s467 + $0x139] sm:$0xff] %v461
        %495 = vst [vmem:[%s467 + $0x141] sm:$0xff] %v462
        %496 = vst [vmem:[%s467 + $0x151] sm:$0xff] %v463
        %497 = vst [vmem:[%s467 + $0x159] sm:$0xff] %v464
        %498 = vst [vmem:[%s467 + $0x169] sm:$0xff] %v465
        %499 = vst [vmem:[%s467 + $0x171] sm:$0xff] %v466
        %p500 = scmp.gt.s32.totalorder %s33, 0
        %v501 = vld [vmem:[%s369] sm:$0xff]
        %v502 = vld [vmem:[%s369 + $0x8] sm:$0xff]
        %s503 = scalar_select %p500, 1, 0
        %v504 = vstv %s503
        %vm505 = vcmp.eq.s32.totalorder %v504, 1
        %v506 = vsel %vm505, %v501, 0.0
        %v507 = vsel %vm505, %v502, 0.0
        %508 = vst [vmem:[#allocation2 + $0x1] sm:$0xff] %v506
        %509 = vst [vmem:[#allocation2 + $0x9] sm:$0xff] %v507
        %p510 = scmp.lt.s32.totalorder %s33, 0
        %v511 = vld [vmem:[%s378] sm:$0xff]
        %v512 = vld [vmem:[%s378 + $0x8] sm:$0xff]
        %s513 = scalar_select %p510, 1, 0
        %v514 = vstv %s513
        %vm515 = vcmp.eq.s32.totalorder %v514, 1
        %v516 = vsel %vm515, %v511, 0.0
        %v517 = vsel %vm515, %v512, 0.0
        %s518 = scalar_lea.vmem [#allocation2], 408
        %519 = vst [vmem:[%s518 + $0x1] sm:$0xff] %v516
        %520 = vst [vmem:[%s518 + $0x9] sm:$0xff] %v517
        %521 = vst [vmem:[#allocation2] sm:$0x1] 0.0
        %522 = vst [vmem:[#allocation2 + $0x18] sm:$0x1] 0.0
        %523 = vst [vmem:[#allocation2 + $0x30] sm:$0x1] 0.0
        %524 = vst [vmem:[#allocation2 + $0x48] sm:$0x1] 0.0
        %525 = vst [vmem:[#allocation2 + $0x60] sm:$0x1] 0.0
        %526 = vst [vmem:[#allocation2 + $0x78] sm:$0x1] 0.0
        %527 = vst [vmem:[#allocation2 + $0x90] sm:$0x1] 0.0
        %528 = vst [vmem:[#allocation2 + $0xa8] sm:$0x1] 0.0
        %529 = vst [vmem:[#allocation2 + $0xc0] sm:$0x1] 0.0
        %530 = vst [vmem:[#allocation2 + $0xd8] sm:$0x1] 0.0
        %531 = vst [vmem:[#allocation2 + $0xf0] sm:$0x1] 0.0
        %532 = vst [vmem:[#allocation2 + $0x108] sm:$0x1] 0.0
        %533 = vst [vmem:[#allocation2 + $0x120] sm:$0x1] 0.0
        %534 = vst [vmem:[#allocation2 + $0x138] sm:$0x1] 0.0
        %535 = vst [vmem:[#allocation2 + $0x150] sm:$0x1] 0.0
        %536 = vst [vmem:[#allocation2 + $0x168] sm:$0x1] 0.0
        %537 = vst [vmem:[#allocation2 + $0x180] sm:$0x1] 0.0
        %538 = vst [vmem:[#allocation2 + $0x198] sm:$0x1] 0.0
        %539 = vst [vmem:[#allocation2 + $0x11] sm:$0x1] 0.0
        %540 = vst [vmem:[#allocation2 + $0x29] sm:$0x1] 0.0
        %541 = vst [vmem:[#allocation2 + $0x41] sm:$0x1] 0.0
        %542 = vst [vmem:[#allocation2 + $0x59] sm:$0x1] 0.0
        %543 = vst [vmem:[#allocation2 + $0x71] sm:$0x1] 0.0
        %544 = vst [vmem:[#allocation2 + $0x89] sm:$0x1] 0.0
        %545 = vst [vmem:[#allocation2 + $0xa1] sm:$0x1] 0.0
        %546 = vst [vmem:[#allocation2 + $0xb9] sm:$0x1] 0.0
        %547 = vst [vmem:[#allocation2 + $0xd1] sm:$0x1] 0.0
        %548 = vst [vmem:[#allocation2 + $0xe9] sm:$0x1] 0.0
        %549 = vst [vmem:[#allocation2 + $0x101] sm:$0x1] 0.0
        %550 = vst [vmem:[#allocation2 + $0x119] sm:$0x1] 0.0
        %551 = vst [vmem:[#allocation2 + $0x131] sm:$0x1] 0.0
        %552 = vst [vmem:[#allocation2 + $0x149] sm:$0x1] 0.0
        %553 = vst [vmem:[#allocation2 + $0x161] sm:$0x1] 0.0
        %554 = vst [vmem:[#allocation2 + $0x179] sm:$0x1] 0.0
        %555 = vst [vmem:[#allocation2 + $0x191] sm:$0x1] 0.0
        %556 = vst [vmem:[#allocation2 + $0x1a9] sm:$0x1] 0.0
        %v557 = vld [vmem:[%s433] sm:$0x1]
        %v559 = vlaneseq
        %v560 = vshrl.u32 %v559, 7
        %v561 = vsub.s32 0, %v560
        %v562 = vrot.slane %v557, %v561
        %v564 = vld [vmem:[#allocation2] sm:$0xff]
        %v565 = vld [vmem:[#allocation2 + $0x8] sm:$0xff]
        %v566 = vld [vmem:[#allocation2 + $0x18] sm:$0xff]
        %v567 = vld [vmem:[#allocation2 + $0x20] sm:$0xff]
        %v568 = vld [vmem:[#allocation2 + $0x30] sm:$0xff]
        %v569 = vld [vmem:[#allocation2 + $0x38] sm:$0xff]
        %v570 = vld [vmem:[#allocation2 + $0x48] sm:$0xff]
        %v571 = vld [vmem:[#allocation2 + $0x50] sm:$0xff]
        %v572 = vld [vmem:[#allocation2 + $0x60] sm:$0xff]
        %v573 = vld [vmem:[#allocation2 + $0x68] sm:$0xff]
        %v574 = vld [vmem:[#allocation2 + $0x78] sm:$0xff]
        %v575 = vld [vmem:[#allocation2 + $0x80] sm:$0xff]
        %v576 = vld [vmem:[#allocation2 + $0x90] sm:$0xff]
        %v577 = vld [vmem:[#allocation2 + $0x98] sm:$0xff]
        %v578 = vld [vmem:[#allocation2 + $0xa8] sm:$0xff]
        %v579 = vld [vmem:[#allocation2 + $0xb0] sm:$0xff]
        %v580 = vld [vmem:[#allocation2 + $0xc0] sm:$0xff]
        %v581 = vld [vmem:[#allocation2 + $0xc8] sm:$0xff]
        %v582 = vld [vmem:[#allocation2 + $0xd8] sm:$0xff]
        %v583 = vld [vmem:[#allocation2 + $0xe0] sm:$0xff]
        %v584 = vld [vmem:[#allocation2 + $0xf0] sm:$0xff]
        %v585 = vld [vmem:[#allocation2 + $0xf8] sm:$0xff]
        %v586 = vld [vmem:[#allocation2 + $0x108] sm:$0xff]
        %v587 = vld [vmem:[#allocation2 + $0x110] sm:$0xff]
        %v588 = vld [vmem:[#allocation2 + $0x120] sm:$0xff]
        %v589 = vld [vmem:[#allocation2 + $0x128] sm:$0xff]
        %v590 = vld [vmem:[#allocation2 + $0x138] sm:$0xff]
        %v591 = vld [vmem:[#allocation2 + $0x140] sm:$0xff]
        %v592 = vld [vmem:[#allocation2 + $0x150] sm:$0xff]
        %v593 = vld [vmem:[#allocation2 + $0x158] sm:$0xff]
        %v594 = vld [vmem:[#allocation2 + $0x168] sm:$0xff]
        %v595 = vld [vmem:[#allocation2 + $0x170] sm:$0xff]
        %v596 = vld [vmem:[#allocation9] sm:$0x1]
        %v597 = vlaneseq
        %v598 = vshrl.u32 %v597, 7
        %v599 = vsub.s32 0, %v598
        %v600 = vrot.slane %v596, %v599
        %v601 = vmul.f32 %v564, %v600
        %v602 = vmul.f32 %v565, %v600
        %v603 = vmul.f32 %v566, %v600
        %v604 = vmul.f32 %v567, %v600
        %v605 = vmul.f32 %v568, %v600
        %v606 = vmul.f32 %v569, %v600
        %v607 = vmul.f32 %v570, %v600
        %v608 = vmul.f32 %v571, %v600
        %v609 = vmul.f32 %v572, %v600
        %v610 = vmul.f32 %v573, %v600
        %v611 = vmul.f32 %v574, %v600
        %v612 = vmul.f32 %v575, %v600
        %v613 = vmul.f32 %v576, %v600
        %v614 = vmul.f32 %v577, %v600
        %v615 = vmul.f32 %v578, %v600
        %v616 = vmul.f32 %v579, %v600
        %v617 = vmul.f32 %v580, %v600
        %v618 = vmul.f32 %v581, %v600
        %v619 = vmul.f32 %v582, %v600
        %v620 = vmul.f32 %v583, %v600
        %v621 = vmul.f32 %v584, %v600
        %v622 = vmul.f32 %v585, %v600
        %v623 = vmul.f32 %v586, %v600
        %v624 = vmul.f32 %v587, %v600
        %v625 = vmul.f32 %v588, %v600
        %v626 = vmul.f32 %v589, %v600
        %v627 = vmul.f32 %v590, %v600
        %v628 = vmul.f32 %v591, %v600
        %v629 = vmul.f32 %v592, %v600
        %v630 = vmul.f32 %v593, %v600
        %v631 = vmul.f32 %v594, %v600
        %v632 = vmul.f32 %v595, %v600
        %v633 = vadd.f32 %v562, %v601
        %v634 = vadd.f32 %v562, %v602
        %v635 = vadd.f32 %v562, %v603
        %v636 = vadd.f32 %v562, %v604
        %v637 = vadd.f32 %v562, %v605
        %v638 = vadd.f32 %v562, %v606
        %v639 = vadd.f32 %v562, %v607
        %v640 = vadd.f32 %v562, %v608
        %v641 = vadd.f32 %v562, %v609
        %v642 = vadd.f32 %v562, %v610
        %v643 = vadd.f32 %v562, %v611
        %v644 = vadd.f32 %v562, %v612
        %v645 = vadd.f32 %v562, %v613
        %v646 = vadd.f32 %v562, %v614
        %v647 = vadd.f32 %v562, %v615
        %v648 = vadd.f32 %v562, %v616
        %v649 = vadd.f32 %v562, %v617
        %v650 = vadd.f32 %v562, %v618
        %v651 = vadd.f32 %v562, %v619
        %v652 = vadd.f32 %v562, %v620
        %v653 = vadd.f32 %v562, %v621
        %v654 = vadd.f32 %v562, %v622
        %v655 = vadd.f32 %v562, %v623
        %v656 = vadd.f32 %v562, %v624
        %v657 = vadd.f32 %v562, %v625
        %v658 = vadd.f32 %v562, %v626
        %v659 = vadd.f32 %v562, %v627
        %v660 = vadd.f32 %v562, %v628
        %v661 = vadd.f32 %v562, %v629
        %v662 = vadd.f32 %v562, %v630
        %v663 = vadd.f32 %v562, %v631
        %v664 = vadd.f32 %v562, %v632
        %v665 = vld [vmem:[#allocation2 + $0x1] sm:$0xff]
        %v666 = vld [vmem:[#allocation2 + $0x9] sm:$0xff]
        %v667 = vld [vmem:[#allocation2 + $0x19] sm:$0xff]
        %v668 = vld [vmem:[#allocation2 + $0x21] sm:$0xff]
        %v669 = vld [vmem:[#allocation2 + $0x31] sm:$0xff]
        %v670 = vld [vmem:[#allocation2 + $0x39] sm:$0xff]
        %v671 = vld [vmem:[#allocation2 + $0x49] sm:$0xff]
        %v672 = vld [vmem:[#allocation2 + $0x51] sm:$0xff]
        %v673 = vld [vmem:[#allocation2 + $0x61] sm:$0xff]
        %v674 = vld [vmem:[#allocation2 + $0x69] sm:$0xff]
        %v675 = vld [vmem:[#allocation2 + $0x79] sm:$0xff]
        %v676 = vld [vmem:[#allocation2 + $0x81] sm:$0xff]
        %v677 = vld [vmem:[#allocation2 + $0x91] sm:$0xff]
        %v678 = vld [vmem:[#allocation2 + $0x99] sm:$0xff]
        %v679 = vld [vmem:[#allocation2 + $0xa9] sm:$0xff]
        %v680 = vld [vmem:[#allocation2 + $0xb1] sm:$0xff]
        %v681 = vld [vmem:[#allocation2 + $0xc1] sm:$0xff]
        %v682 = vld [vmem:[#allocation2 + $0xc9] sm:$0xff]
        %v683 = vld [vmem:[#allocation2 + $0xd9] sm:$0xff]
        %v684 = vld [vmem:[#allocation2 + $0xe1] sm:$0xff]
        %v685 = vld [vmem:[#allocation2 + $0xf1] sm:$0xff]
        %v686 = vld [vmem:[#allocation2 + $0xf9] sm:$0xff]
        %v687 = vld [vmem:[#allocation2 + $0x109] sm:$0xff]
        %v688 = vld [vmem:[#allocation2 + $0x111] sm:$0xff]
        %v689 = vld [vmem:[#allocation2 + $0x121] sm:$0xff]
        %v690 = vld [vmem:[#allocation2 + $0x129] sm:$0xff]
        %v691 = vld [vmem:[#allocation2 + $0x139] sm:$0xff]
        %v692 = vld [vmem:[#allocation2 + $0x141] sm:$0xff]
        %v693 = vld [vmem:[#allocation2 + $0x151] sm:$0xff]
        %v694 = vld [vmem:[#allocation2 + $0x159] sm:$0xff]
        %v695 = vld [vmem:[#allocation2 + $0x169] sm:$0xff]
        %v696 = vld [vmem:[#allocation2 + $0x171] sm:$0xff]
        %v697 = vld [vmem:[#allocation9 + $0x1] sm:$0x1]
        %v698 = vlaneseq
        %v699 = vshrl.u32 %v698, 7
        %v700 = vsub.s32 0, %v699
        %v701 = vrot.slane %v697, %v700
        %v702 = vmul.f32 %v665, %v701
        %v703 = vmul.f32 %v666, %v701
        %v704 = vmul.f32 %v667, %v701
        %v705 = vmul.f32 %v668, %v701
        %v706 = vmul.f32 %v669, %v701
        %v707 = vmul.f32 %v670, %v701
        %v708 = vmul.f32 %v671, %v701
        %v709 = vmul.f32 %v672, %v701
        %v710 = vmul.f32 %v673, %v701
        %v711 = vmul.f32 %v674, %v701
        %v712 = vmul.f32 %v675, %v701
        %v713 = vmul.f32 %v676, %v701
        %v714 = vmul.f32 %v677, %v701
        %v715 = vmul.f32 %v678, %v701
        %v716 = vmul.f32 %v679, %v701
        %v717 = vmul.f32 %v680, %v701
        %v718 = vmul.f32 %v681, %v701
        %v719 = vmul.f32 %v682, %v701
        %v720 = vmul.f32 %v683, %v701
        %v721 = vmul.f32 %v684, %v701
        %v722 = vmul.f32 %v685, %v701
        %v723 = vmul.f32 %v686, %v701
        %v724 = vmul.f32 %v687, %v701
        %v725 = vmul.f32 %v688, %v701
        %v726 = vmul.f32 %v689, %v701
        %v727 = vmul.f32 %v690, %v701
        %v728 = vmul.f32 %v691, %v701
        %v729 = vmul.f32 %v692, %v701
        %v730 = vmul.f32 %v693, %v701
        %v731 = vmul.f32 %v694, %v701
        %v732 = vmul.f32 %v695, %v701
        %v733 = vmul.f32 %v696, %v701
        %v734 = vadd.f32 %v633, %v702
        %v735 = vadd.f32 %v634, %v703
        %v736 = vadd.f32 %v635, %v704
        %v737 = vadd.f32 %v636, %v705
        %v738 = vadd.f32 %v637, %v706
        %v739 = vadd.f32 %v638, %v707
        %v740 = vadd.f32 %v639, %v708
        %v741 = vadd.f32 %v640, %v709
        %v742 = vadd.f32 %v641, %v710
        %v743 = vadd.f32 %v642, %v711
        %v744 = vadd.f32 %v643, %v712
        %v745 = vadd.f32 %v644, %v713
        %v746 = vadd.f32 %v645, %v714
        %v747 = vadd.f32 %v646, %v715
        %v748 = vadd.f32 %v647, %v716
        %v749 = vadd.f32 %v648, %v717
        %v750 = vadd.f32 %v649, %v718
        %v751 = vadd.f32 %v650, %v719
        %v752 = vadd.f32 %v651, %v720
        %v753 = vadd.f32 %v652, %v721
        %v754 = vadd.f32 %v653, %v722
        %v755 = vadd.f32 %v654, %v723
        %v756 = vadd.f32 %v655, %v724
        %v757 = vadd.f32 %v656, %v725
        %v758 = vadd.f32 %v657, %v726
        %v759 = vadd.f32 %v658, %v727
        %v760 = vadd.f32 %v659, %v728
        %v761 = vadd.f32 %v660, %v729
        %v762 = vadd.f32 %v661, %v730
        %v763 = vadd.f32 %v662, %v731
        %v764 = vadd.f32 %v663, %v732
        %v765 = vadd.f32 %v664, %v733
        %v766 = vld [vmem:[#allocation2 + $0x2] sm:$0xff]
        %v767 = vld [vmem:[#allocation2 + $0xa] sm:$0xff]
        %v768 = vld [vmem:[#allocation2 + $0x1a] sm:$0xff]
        %v769 = vld [vmem:[#allocation2 + $0x22] sm:$0xff]
        %v770 = vld [vmem:[#allocation2 + $0x32] sm:$0xff]
        %v771 = vld [vmem:[#allocation2 + $0x3a] sm:$0xff]
        %v772 = vld [vmem:[#allocation2 + $0x4a] sm:$0xff]
        %v773 = vld [vmem:[#allocation2 + $0x52] sm:$0xff]
        %v774 = vld [vmem:[#allocation2 + $0x62] sm:$0xff]
        %v775 = vld [vmem:[#allocation2 + $0x6a] sm:$0xff]
        %v776 = vld [vmem:[#allocation2 + $0x7a] sm:$0xff]
        %v777 = vld [vmem:[#allocation2 + $0x82] sm:$0xff]
        %v778 = vld [vmem:[#allocation2 + $0x92] sm:$0xff]
        %v779 = vld [vmem:[#allocation2 + $0x9a] sm:$0xff]
        %v780 = vld [vmem:[#allocation2 + $0xaa] sm:$0xff]
        %v781 = vld [vmem:[#allocation2 + $0xb2] sm:$0xff]
        %v782 = vld [vmem:[#allocation2 + $0xc2] sm:$0xff]
        %v783 = vld [vmem:[#allocation2 + $0xca] sm:$0xff]
        %v784 = vld [vmem:[#allocation2 + $0xda] sm:$0xff]
        %v785 = vld [vmem:[#allocation2 + $0xe2] sm:$0xff]
        %v786 = vld [vmem:[#allocation2 + $0xf2] sm:$0xff]
        %v787 = vld [vmem:[#allocation2 + $0xfa] sm:$0xff]
        %v788 = vld [vmem:[#allocation2 + $0x10a] sm:$0xff]
        %v789 = vld [vmem:[#allocation2 + $0x112] sm:$0xff]
        %v790 = vld [vmem:[#allocation2 + $0x122] sm:$0xff]
        %v791 = vld [vmem:[#allocation2 + $0x12a] sm:$0xff]
        %v792 = vld [vmem:[#allocation2 + $0x13a] sm:$0xff]
        %v793 = vld [vmem:[#allocation2 + $0x142] sm:$0xff]
        %v794 = vld [vmem:[#allocation2 + $0x152] sm:$0xff]
        %v795 = vld [vmem:[#allocation2 + $0x15a] sm:$0xff]
        %v796 = vld [vmem:[#allocation2 + $0x16a] sm:$0xff]
        %v797 = vld [vmem:[#allocation2 + $0x172] sm:$0xff]
        %v798 = vld [vmem:[#allocation9 + $0x2] sm:$0x1]
        %v799 = vlaneseq
        %v800 = vshrl.u32 %v799, 7
        %v801 = vsub.s32 0, %v800
        %v802 = vrot.slane %v798, %v801
        %v803 = vmul.f32 %v766, %v802
        %v804 = vmul.f32 %v767, %v802
        %v805 = vmul.f32 %v768, %v802
        %v806 = vmul.f32 %v769, %v802
        %v807 = vmul.f32 %v770, %v802
        %v808 = vmul.f32 %v771, %v802
        %v809 = vmul.f32 %v772, %v802
        %v810 = vmul.f32 %v773, %v802
        %v811 = vmul.f32 %v774, %v802
        %v812 = vmul.f32 %v775, %v802
        %v813 = vmul.f32 %v776, %v802
        %v814 = vmul.f32 %v777, %v802
        %v815 = vmul.f32 %v778, %v802
        %v816 = vmul.f32 %v779, %v802
        %v817 = vmul.f32 %v780, %v802
        %v818 = vmul.f32 %v781, %v802
        %v819 = vmul.f32 %v782, %v802
        %v820 = vmul.f32 %v783, %v802
        %v821 = vmul.f32 %v784, %v802
        %v822 = vmul.f32 %v785, %v802
        %v823 = vmul.f32 %v786, %v802
        %v824 = vmul.f32 %v787, %v802
        %v825 = vmul.f32 %v788, %v802
        %v826 = vmul.f32 %v789, %v802
        %v827 = vmul.f32 %v790, %v802
        %v828 = vmul.f32 %v791, %v802
        %v829 = vmul.f32 %v792, %v802
        %v830 = vmul.f32 %v793, %v802
        %v831 = vmul.f32 %v794, %v802
        %v832 = vmul.f32 %v795, %v802
        %v833 = vmul.f32 %v796, %v802
        %v834 = vmul.f32 %v797, %v802
        %v835 = vadd.f32 %v734, %v803
        %v836 = vadd.f32 %v735, %v804
        %v837 = vadd.f32 %v736, %v805
        %v838 = vadd.f32 %v737, %v806
        %v839 = vadd.f32 %v738, %v807
        %v840 = vadd.f32 %v739, %v808
        %v841 = vadd.f32 %v740, %v809
        %v842 = vadd.f32 %v741, %v810
        %v843 = vadd.f32 %v742, %v811
        %v844 = vadd.f32 %v743, %v812
        %v845 = vadd.f32 %v744, %v813
        %v846 = vadd.f32 %v745, %v814
        %v847 = vadd.f32 %v746, %v815
        %v848 = vadd.f32 %v747, %v816
        %v849 = vadd.f32 %v748, %v817
        %v850 = vadd.f32 %v749, %v818
        %v851 = vadd.f32 %v750, %v819
        %v852 = vadd.f32 %v751, %v820
        %v853 = vadd.f32 %v752, %v821
        %v854 = vadd.f32 %v753, %v822
        %v855 = vadd.f32 %v754, %v823
        %v856 = vadd.f32 %v755, %v824
        %v857 = vadd.f32 %v756, %v825
        %v858 = vadd.f32 %v757, %v826
        %v859 = vadd.f32 %v758, %v827
        %v860 = vadd.f32 %v759, %v828
        %v861 = vadd.f32 %v760, %v829
        %v862 = vadd.f32 %v761, %v830
        %v863 = vadd.f32 %v762, %v831
        %v864 = vadd.f32 %v763, %v832
        %v865 = vadd.f32 %v764, %v833
        %v866 = vadd.f32 %v765, %v834
        %v867 = vld [vmem:[%s467] sm:$0xff]
        %v868 = vld [vmem:[%s467 + $0x8] sm:$0xff]
        %v869 = vld [vmem:[%s467 + $0x18] sm:$0xff]
        %v870 = vld [vmem:[%s467 + $0x20] sm:$0xff]
        %v871 = vld [vmem:[%s467 + $0x30] sm:$0xff]
        %v872 = vld [vmem:[%s467 + $0x38] sm:$0xff]
        %v873 = vld [vmem:[%s467 + $0x48] sm:$0xff]
        %v874 = vld [vmem:[%s467 + $0x50] sm:$0xff]
        %v875 = vld [vmem:[%s467 + $0x60] sm:$0xff]
        %v876 = vld [vmem:[%s467 + $0x68] sm:$0xff]
        %v877 = vld [vmem:[%s467 + $0x78] sm:$0xff]
        %v878 = vld [vmem:[%s467 + $0x80] sm:$0xff]
        %v879 = vld [vmem:[%s467 + $0x90] sm:$0xff]
        %v880 = vld [vmem:[%s467 + $0x98] sm:$0xff]
        %v881 = vld [vmem:[%s467 + $0xa8] sm:$0xff]
        %v882 = vld [vmem:[%s467 + $0xb0] sm:$0xff]
        %v883 = vld [vmem:[%s467 + $0xc0] sm:$0xff]
        %v884 = vld [vmem:[%s467 + $0xc8] sm:$0xff]
        %v885 = vld [vmem:[%s467 + $0xd8] sm:$0xff]
        %v886 = vld [vmem:[%s467 + $0xe0] sm:$0xff]
        %v887 = vld [vmem:[%s467 + $0xf0] sm:$0xff]
        %v888 = vld [vmem:[%s467 + $0xf8] sm:$0xff]
        %v889 = vld [vmem:[%s467 + $0x108] sm:$0xff]
        %v890 = vld [vmem:[%s467 + $0x110] sm:$0xff]
        %v891 = vld [vmem:[%s467 + $0x120] sm:$0xff]
        %v892 = vld [vmem:[%s467 + $0x128] sm:$0xff]
        %v893 = vld [vmem:[%s467 + $0x138] sm:$0xff]
        %v894 = vld [vmem:[%s467 + $0x140] sm:$0xff]
        %v895 = vld [vmem:[%s467 + $0x150] sm:$0xff]
        %v896 = vld [vmem:[%s467 + $0x158] sm:$0xff]
        %v897 = vld [vmem:[%s467 + $0x168] sm:$0xff]
        %v898 = vld [vmem:[%s467 + $0x170] sm:$0xff]
        %s899 = scalar_lea.vmem [#allocation9], 4
        %v900 = vld [vmem:[%s899] sm:$0x1]
        %v901 = vlaneseq
        %v902 = vshrl.u32 %v901, 7
        %v903 = vsub.s32 0, %v902
        %v904 = vrot.slane %v900, %v903
        %v905 = vmul.f32 %v867, %v904
        %v906 = vmul.f32 %v868, %v904
        %v907 = vmul.f32 %v869, %v904
        %v908 = vmul.f32 %v870, %v904
        %v909 = vmul.f32 %v871, %v904
        %v910 = vmul.f32 %v872, %v904
        %v911 = vmul.f32 %v873, %v904
        %v912 = vmul.f32 %v874, %v904
        %v913 = vmul.f32 %v875, %v904
        %v914 = vmul.f32 %v876, %v904
        %v915 = vmul.f32 %v877, %v904
        %v916 = vmul.f32 %v878, %v904
        %v917 = vmul.f32 %v879, %v904
        %v918 = vmul.f32 %v880, %v904
        %v919 = vmul.f32 %v881, %v904
        %v920 = vmul.f32 %v882, %v904
        %v921 = vmul.f32 %v883, %v904
        %v922 = vmul.f32 %v884, %v904
        %v923 = vmul.f32 %v885, %v904
        %v924 = vmul.f32 %v886, %v904
        %v925 = vmul.f32 %v887, %v904
        %v926 = vmul.f32 %v888, %v904
        %v927 = vmul.f32 %v889, %v904
        %v928 = vmul.f32 %v890, %v904
        %v929 = vmul.f32 %v891, %v904
        %v930 = vmul.f32 %v892, %v904
        %v931 = vmul.f32 %v893, %v904
        %v932 = vmul.f32 %v894, %v904
        %v933 = vmul.f32 %v895, %v904
        %v934 = vmul.f32 %v896, %v904
        %v935 = vmul.f32 %v897, %v904
        %v936 = vmul.f32 %v898, %v904
        %v937 = vadd.f32 %v835, %v905
        %v938 = vadd.f32 %v836, %v906
        %v939 = vadd.f32 %v837, %v907
        %v940 = vadd.f32 %v838, %v908
        %v941 = vadd.f32 %v839, %v909
        %v942 = vadd.f32 %v840, %v910
        %v943 = vadd.f32 %v841, %v911
        %v944 = vadd.f32 %v842, %v912
        %v945 = vadd.f32 %v843, %v913
        %v946 = vadd.f32 %v844, %v914
        %v947 = vadd.f32 %v845, %v915
        %v948 = vadd.f32 %v846, %v916
        %v949 = vadd.f32 %v847, %v917
        %v950 = vadd.f32 %v848, %v918
        %v951 = vadd.f32 %v849, %v919
        %v952 = vadd.f32 %v850, %v920
        %v953 = vadd.f32 %v851, %v921
        %v954 = vadd.f32 %v852, %v922
        %v955 = vadd.f32 %v853, %v923
        %v956 = vadd.f32 %v854, %v924
        %v957 = vadd.f32 %v855, %v925
        %v958 = vadd.f32 %v856, %v926
        %v959 = vadd.f32 %v857, %v927
        %v960 = vadd.f32 %v858, %v928
        %v961 = vadd.f32 %v859, %v929
        %v962 = vadd.f32 %v860, %v930
        %v963 = vadd.f32 %v861, %v931
        %v964 = vadd.f32 %v862, %v932
        %v965 = vadd.f32 %v863, %v933
        %v966 = vadd.f32 %v864, %v934
        %v967 = vadd.f32 %v865, %v935
        %v968 = vadd.f32 %v866, %v936
        %v969 = vld [vmem:[%s467 + $0x1] sm:$0xff]
        %v970 = vld [vmem:[%s467 + $0x9] sm:$0xff]
        %v971 = vld [vmem:[%s467 + $0x19] sm:$0xff]
        %v972 = vld [vmem:[%s467 + $0x21] sm:$0xff]
        %v973 = vld [vmem:[%s467 + $0x31] sm:$0xff]
        %v974 = vld [vmem:[%s467 + $0x39] sm:$0xff]
        %v975 = vld [vmem:[%s467 + $0x49] sm:$0xff]
        %v976 = vld [vmem:[%s467 + $0x51] sm:$0xff]
        %v977 = vld [vmem:[%s467 + $0x61] sm:$0xff]
        %v978 = vld [vmem:[%s467 + $0x69] sm:$0xff]
        %v979 = vld [vmem:[%s467 + $0x79] sm:$0xff]
        %v980 = vld [vmem:[%s467 + $0x81] sm:$0xff]
        %v981 = vld [vmem:[%s467 + $0x91] sm:$0xff]
        %v982 = vld [vmem:[%s467 + $0x99] sm:$0xff]
        %v983 = vld [vmem:[%s467 + $0xa9] sm:$0xff]
        %v984 = vld [vmem:[%s467 + $0xb1] sm:$0xff]
        %v985 = vld [vmem:[%s467 + $0xc1] sm:$0xff]
        %v986 = vld [vmem:[%s467 + $0xc9] sm:$0xff]
        %v987 = vld [vmem:[%s467 + $0xd9] sm:$0xff]
        %v988 = vld [vmem:[%s467 + $0xe1] sm:$0xff]
        %v989 = vld [vmem:[%s467 + $0xf1] sm:$0xff]
        %v990 = vld [vmem:[%s467 + $0xf9] sm:$0xff]
        %v991 = vld [vmem:[%s467 + $0x109] sm:$0xff]
        %v992 = vld [vmem:[%s467 + $0x111] sm:$0xff]
        %v993 = vld [vmem:[%s467 + $0x121] sm:$0xff]
        %v994 = vld [vmem:[%s467 + $0x129] sm:$0xff]
        %v995 = vld [vmem:[%s467 + $0x139] sm:$0xff]
        %v996 = vld [vmem:[%s467 + $0x141] sm:$0xff]
        %v997 = vld [vmem:[%s467 + $0x151] sm:$0xff]
        %v998 = vld [vmem:[%s467 + $0x159] sm:$0xff]
        %v999 = vld [vmem:[%s467 + $0x169] sm:$0xff]
        %v1000 = vld [vmem:[%s467 + $0x171] sm:$0xff]
        %v1001 = vld [vmem:[%s899 + $0x1] sm:$0x1]
        %v1002 = vlaneseq
        %v1003 = vshrl.u32 %v1002, 7
        %v1004 = vsub.s32 0, %v1003
        %v1005 = vrot.slane %v1001, %v1004
        %v1006 = vmul.f32 %v969, %v1005
        %v1007 = vmul.f32 %v970, %v1005
        %v1008 = vmul.f32 %v971, %v1005
        %v1009 = vmul.f32 %v972, %v1005
        %v1010 = vmul.f32 %v973, %v1005
        %v1011 = vmul.f32 %v974, %v1005
        %v1012 = vmul.f32 %v975, %v1005
        %v1013 = vmul.f32 %v976, %v1005
        %v1014 = vmul.f32 %v977, %v1005
        %v1015 = vmul.f32 %v978, %v1005
        %v1016 = vmul.f32 %v979, %v1005
        %v1017 = vmul.f32 %v980, %v1005
        %v1018 = vmul.f32 %v981, %v1005
        %v1019 = vmul.f32 %v982, %v1005
        %v1020 = vmul.f32 %v983, %v1005
        %v1021 = vmul.f32 %v984, %v1005
        %v1022 = vmul.f32 %v985, %v1005
        %v1023 = vmul.f32 %v986, %v1005
        %v1024 = vmul.f32 %v987, %v1005
        %v1025 = vmul.f32 %v988, %v1005
        %v1026 = vmul.f32 %v989, %v1005
        %v1027 = vmul.f32 %v990, %v1005
        %v1028 = vmul.f32 %v991, %v1005
        %v1029 = vmul.f32 %v992, %v1005
        %v1030 = vmul.f32 %v993, %v1005
        %v1031 = vmul.f32 %v994, %v1005
        %v1032 = vmul.f32 %v995, %v1005
        %v1033 = vmul.f32 %v996, %v1005
        %v1034 = vmul.f32 %v997, %v1005
        %v1035 = vmul.f32 %v998, %v1005
        %v1036 = vmul.f32 %v999, %v1005
        %v1037 = vmul.f32 %v1000, %v1005
        %v1038 = vadd.f32 %v937, %v1006
        %v1039 = vadd.f32 %v938, %v1007
        %v1040 = vadd.f32 %v939, %v1008
        %v1041 = vadd.f32 %v940, %v1009
        %v1042 = vadd.f32 %v941, %v1010
        %v1043 = vadd.f32 %v942, %v1011
        %v1044 = vadd.f32 %v943, %v1012
        %v1045 = vadd.f32 %v944, %v1013
        %v1046 = vadd.f32 %v945, %v1014
        %v1047 = vadd.f32 %v946, %v1015
        %v1048 = vadd.f32 %v947, %v1016
        %v1049 = vadd.f32 %v948, %v1017
        %v1050 = vadd.f32 %v949, %v1018
        %v1051 = vadd.f32 %v950, %v1019
        %v1052 = vadd.f32 %v951, %v1020
        %v1053 = vadd.f32 %v952, %v1021
        %v1054 = vadd.f32 %v953, %v1022
        %v1055 = vadd.f32 %v954, %v1023
        %v1056 = vadd.f32 %v955, %v1024
        %v1057 = vadd.f32 %v956, %v1025
        %v1058 = vadd.f32 %v957, %v1026
        %v1059 = vadd.f32 %v958, %v1027
        %v1060 = vadd.f32 %v959, %v1028
        %v1061 = vadd.f32 %v960, %v1029
        %v1062 = vadd.f32 %v961, %v1030
        %v1063 = vadd.f32 %v962, %v1031
        %v1064 = vadd.f32 %v963, %v1032
        %v1065 = vadd.f32 %v964, %v1033
        %v1066 = vadd.f32 %v965, %v1034
        %v1067 = vadd.f32 %v966, %v1035
        %v1068 = vadd.f32 %v967, %v1036
        %v1069 = vadd.f32 %v968, %v1037
        %v1070 = vld [vmem:[%s467 + $0x2] sm:$0xff]
        %v1071 = vld [vmem:[%s467 + $0xa] sm:$0xff]
        %v1072 = vld [vmem:[%s467 + $0x1a] sm:$0xff]
        %v1073 = vld [vmem:[%s467 + $0x22] sm:$0xff]
        %v1074 = vld [vmem:[%s467 + $0x32] sm:$0xff]
        %v1075 = vld [vmem:[%s467 + $0x3a] sm:$0xff]
        %v1076 = vld [vmem:[%s467 + $0x4a] sm:$0xff]
        %v1077 = vld [vmem:[%s467 + $0x52] sm:$0xff]
        %v1078 = vld [vmem:[%s467 + $0x62] sm:$0xff]
        %v1079 = vld [vmem:[%s467 + $0x6a] sm:$0xff]
        %v1080 = vld [vmem:[%s467 + $0x7a] sm:$0xff]
        %v1081 = vld [vmem:[%s467 + $0x82] sm:$0xff]
        %v1082 = vld [vmem:[%s467 + $0x92] sm:$0xff]
        %v1083 = vld [vmem:[%s467 + $0x9a] sm:$0xff]
        %v1084 = vld [vmem:[%s467 + $0xaa] sm:$0xff]
        %v1085 = vld [vmem:[%s467 + $0xb2] sm:$0xff]
        %v1086 = vld [vmem:[%s467 + $0xc2] sm:$0xff]
        %v1087 = vld [vmem:[%s467 + $0xca] sm:$0xff]
        %v1088 = vld [vmem:[%s467 + $0xda] sm:$0xff]
        %v1089 = vld [vmem:[%s467 + $0xe2] sm:$0xff]
        %v1090 = vld [vmem:[%s467 + $0xf2] sm:$0xff]
        %v1091 = vld [vmem:[%s467 + $0xfa] sm:$0xff]
        %v1092 = vld [vmem:[%s467 + $0x10a] sm:$0xff]
        %v1093 = vld [vmem:[%s467 + $0x112] sm:$0xff]
        %v1094 = vld [vmem:[%s467 + $0x122] sm:$0xff]
        %v1095 = vld [vmem:[%s467 + $0x12a] sm:$0xff]
        %v1096 = vld [vmem:[%s467 + $0x13a] sm:$0xff]
        %v1097 = vld [vmem:[%s467 + $0x142] sm:$0xff]
        %v1098 = vld [vmem:[%s467 + $0x152] sm:$0xff]
        %v1099 = vld [vmem:[%s467 + $0x15a] sm:$0xff]
        %v1100 = vld [vmem:[%s467 + $0x16a] sm:$0xff]
        %v1101 = vld [vmem:[%s467 + $0x172] sm:$0xff]
        %v1102 = vld [vmem:[%s899 + $0x2] sm:$0x1]
        %v1103 = vlaneseq
        %v1104 = vshrl.u32 %v1103, 7
        %v1105 = vsub.s32 0, %v1104
        %v1106 = vrot.slane %v1102, %v1105
        %v1107 = vmul.f32 %v1070, %v1106
        %v1108 = vmul.f32 %v1071, %v1106
        %v1109 = vmul.f32 %v1072, %v1106
        %v1110 = vmul.f32 %v1073, %v1106
        %v1111 = vmul.f32 %v1074, %v1106
        %v1112 = vmul.f32 %v1075, %v1106
        %v1113 = vmul.f32 %v1076, %v1106
        %v1114 = vmul.f32 %v1077, %v1106
        %v1115 = vmul.f32 %v1078, %v1106
        %v1116 = vmul.f32 %v1079, %v1106
        %v1117 = vmul.f32 %v1080, %v1106
        %v1118 = vmul.f32 %v1081, %v1106
        %v1119 = vmul.f32 %v1082, %v1106
        %v1120 = vmul.f32 %v1083, %v1106
        %v1121 = vmul.f32 %v1084, %v1106
        %v1122 = vmul.f32 %v1085, %v1106
        %v1123 = vmul.f32 %v1086, %v1106
        %v1124 = vmul.f32 %v1087, %v1106
        %v1125 = vmul.f32 %v1088, %v1106
        %v1126 = vmul.f32 %v1089, %v1106
        %v1127 = vmul.f32 %v1090, %v1106
        %v1128 = vmul.f32 %v1091, %v1106
        %v1129 = vmul.f32 %v1092, %v1106
        %v1130 = vmul.f32 %v1093, %v1106
        %v1131 = vmul.f32 %v1094, %v1106
        %v1132 = vmul.f32 %v1095, %v1106
        %v1133 = vmul.f32 %v1096, %v1106
        %v1134 = vmul.f32 %v1097, %v1106
        %v1135 = vmul.f32 %v1098, %v1106
        %v1136 = vmul.f32 %v1099, %v1106
        %v1137 = vmul.f32 %v1100, %v1106
        %v1138 = vmul.f32 %v1101, %v1106
        %v1139 = vadd.f32 %v1038, %v1107
        %v1140 = vadd.f32 %v1039, %v1108
        %v1141 = vadd.f32 %v1040, %v1109
        %v1142 = vadd.f32 %v1041, %v1110
        %v1143 = vadd.f32 %v1042, %v1111
        %v1144 = vadd.f32 %v1043, %v1112
        %v1145 = vadd.f32 %v1044, %v1113
        %v1146 = vadd.f32 %v1045, %v1114
        %v1147 = vadd.f32 %v1046, %v1115
        %v1148 = vadd.f32 %v1047, %v1116
        %v1149 = vadd.f32 %v1048, %v1117
        %v1150 = vadd.f32 %v1049, %v1118
        %v1151 = vadd.f32 %v1050, %v1119
        %v1152 = vadd.f32 %v1051, %v1120
        %v1153 = vadd.f32 %v1052, %v1121
        %v1154 = vadd.f32 %v1053, %v1122
        %v1155 = vadd.f32 %v1054, %v1123
        %v1156 = vadd.f32 %v1055, %v1124
        %v1157 = vadd.f32 %v1056, %v1125
        %v1158 = vadd.f32 %v1057, %v1126
        %v1159 = vadd.f32 %v1058, %v1127
        %v1160 = vadd.f32 %v1059, %v1128
        %v1161 = vadd.f32 %v1060, %v1129
        %v1162 = vadd.f32 %v1061, %v1130
        %v1163 = vadd.f32 %v1062, %v1131
        %v1164 = vadd.f32 %v1063, %v1132
        %v1165 = vadd.f32 %v1064, %v1133
        %v1166 = vadd.f32 %v1065, %v1134
        %v1167 = vadd.f32 %v1066, %v1135
        %v1168 = vadd.f32 %v1067, %v1136
        %v1169 = vadd.f32 %v1068, %v1137
        %v1170 = vadd.f32 %v1069, %v1138
        %s1171 = scalar_lea.vmem [#allocation2], 48
        %v1172 = vld [vmem:[%s1171] sm:$0xff]
        %v1173 = vld [vmem:[%s1171 + $0x8] sm:$0xff]
        %v1174 = vld [vmem:[%s1171 + $0x18] sm:$0xff]
        %v1175 = vld [vmem:[%s1171 + $0x20] sm:$0xff]
        %v1176 = vld [vmem:[%s1171 + $0x30] sm:$0xff]
        %v1177 = vld [vmem:[%s1171 + $0x38] sm:$0xff]
        %v1178 = vld [vmem:[%s1171 + $0x48] sm:$0xff]
        %v1179 = vld [vmem:[%s1171 + $0x50] sm:$0xff]
        %v1180 = vld [vmem:[%s1171 + $0x60] sm:$0xff]
        %v1181 = vld [vmem:[%s1171 + $0x68] sm:$0xff]
        %v1182 = vld [vmem:[%s1171 + $0x78] sm:$0xff]
        %v1183 = vld [vmem:[%s1171 + $0x80] sm:$0xff]
        %v1184 = vld [vmem:[%s1171 + $0x90] sm:$0xff]
        %v1185 = vld [vmem:[%s1171 + $0x98] sm:$0xff]
        %v1186 = vld [vmem:[%s1171 + $0xa8] sm:$0xff]
        %v1187 = vld [vmem:[%s1171 + $0xb0] sm:$0xff]
        %v1188 = vld [vmem:[%s1171 + $0xc0] sm:$0xff]
        %v1189 = vld [vmem:[%s1171 + $0xc8] sm:$0xff]
        %v1190 = vld [vmem:[%s1171 + $0xd8] sm:$0xff]
        %v1191 = vld [vmem:[%s1171 + $0xe0] sm:$0xff]
        %v1192 = vld [vmem:[%s1171 + $0xf0] sm:$0xff]
        %v1193 = vld [vmem:[%s1171 + $0xf8] sm:$0xff]
        %v1194 = vld [vmem:[%s1171 + $0x108] sm:$0xff]
        %v1195 = vld [vmem:[%s1171 + $0x110] sm:$0xff]
        %v1196 = vld [vmem:[%s1171 + $0x120] sm:$0xff]
        %v1197 = vld [vmem:[%s1171 + $0x128] sm:$0xff]
        %v1198 = vld [vmem:[%s1171 + $0x138] sm:$0xff]
        %v1199 = vld [vmem:[%s1171 + $0x140] sm:$0xff]
        %v1200 = vld [vmem:[%s1171 + $0x150] sm:$0xff]
        %v1201 = vld [vmem:[%s1171 + $0x158] sm:$0xff]
        %v1202 = vld [vmem:[%s1171 + $0x168] sm:$0xff]
        %v1203 = vld [vmem:[%s1171 + $0x170] sm:$0xff]
        %s1204 = scalar_lea.vmem [#allocation9], 8
        %v1205 = vld [vmem:[%s1204] sm:$0x1]
        %v1206 = vlaneseq
        %v1207 = vshrl.u32 %v1206, 7
        %v1208 = vsub.s32 0, %v1207
        %v1209 = vrot.slane %v1205, %v1208
        %v1210 = vmul.f32 %v1172, %v1209
        %v1211 = vmul.f32 %v1173, %v1209
        %v1212 = vmul.f32 %v1174, %v1209
        %v1213 = vmul.f32 %v1175, %v1209
        %v1214 = vmul.f32 %v1176, %v1209
        %v1215 = vmul.f32 %v1177, %v1209
        %v1216 = vmul.f32 %v1178, %v1209
        %v1217 = vmul.f32 %v1179, %v1209
        %v1218 = vmul.f32 %v1180, %v1209
        %v1219 = vmul.f32 %v1181, %v1209
        %v1220 = vmul.f32 %v1182, %v1209
        %v1221 = vmul.f32 %v1183, %v1209
        %v1222 = vmul.f32 %v1184, %v1209
        %v1223 = vmul.f32 %v1185, %v1209
        %v1224 = vmul.f32 %v1186, %v1209
        %v1225 = vmul.f32 %v1187, %v1209
        %v1226 = vmul.f32 %v1188, %v1209
        %v1227 = vmul.f32 %v1189, %v1209
        %v1228 = vmul.f32 %v1190, %v1209
        %v1229 = vmul.f32 %v1191, %v1209
        %v1230 = vmul.f32 %v1192, %v1209
        %v1231 = vmul.f32 %v1193, %v1209
        %v1232 = vmul.f32 %v1194, %v1209
        %v1233 = vmul.f32 %v1195, %v1209
        %v1234 = vmul.f32 %v1196, %v1209
        %v1235 = vmul.f32 %v1197, %v1209
        %v1236 = vmul.f32 %v1198, %v1209
        %v1237 = vmul.f32 %v1199, %v1209
        %v1238 = vmul.f32 %v1200, %v1209
        %v1239 = vmul.f32 %v1201, %v1209
        %v1240 = vmul.f32 %v1202, %v1209
        %v1241 = vmul.f32 %v1203, %v1209
        %v1242 = vadd.f32 %v1139, %v1210
        %v1243 = vadd.f32 %v1140, %v1211
        %v1244 = vadd.f32 %v1141, %v1212
        %v1245 = vadd.f32 %v1142, %v1213
        %v1246 = vadd.f32 %v1143, %v1214
        %v1247 = vadd.f32 %v1144, %v1215
        %v1248 = vadd.f32 %v1145, %v1216
        %v1249 = vadd.f32 %v1146, %v1217
        %v1250 = vadd.f32 %v1147, %v1218
        %v1251 = vadd.f32 %v1148, %v1219
        %v1252 = vadd.f32 %v1149, %v1220
        %v1253 = vadd.f32 %v1150, %v1221
        %v1254 = vadd.f32 %v1151, %v1222
        %v1255 = vadd.f32 %v1152, %v1223
        %v1256 = vadd.f32 %v1153, %v1224
        %v1257 = vadd.f32 %v1154, %v1225
        %v1258 = vadd.f32 %v1155, %v1226
        %v1259 = vadd.f32 %v1156, %v1227
        %v1260 = vadd.f32 %v1157, %v1228
        %v1261 = vadd.f32 %v1158, %v1229
        %v1262 = vadd.f32 %v1159, %v1230
        %v1263 = vadd.f32 %v1160, %v1231
        %v1264 = vadd.f32 %v1161, %v1232
        %v1265 = vadd.f32 %v1162, %v1233
        %v1266 = vadd.f32 %v1163, %v1234
        %v1267 = vadd.f32 %v1164, %v1235
        %v1268 = vadd.f32 %v1165, %v1236
        %v1269 = vadd.f32 %v1166, %v1237
        %v1270 = vadd.f32 %v1167, %v1238
        %v1271 = vadd.f32 %v1168, %v1239
        %v1272 = vadd.f32 %v1169, %v1240
        %v1273 = vadd.f32 %v1170, %v1241
        %v1274 = vld [vmem:[%s1171 + $0x1] sm:$0xff]
        %v1275 = vld [vmem:[%s1171 + $0x9] sm:$0xff]
        %v1276 = vld [vmem:[%s1171 + $0x19] sm:$0xff]
        %v1277 = vld [vmem:[%s1171 + $0x21] sm:$0xff]
        %v1278 = vld [vmem:[%s1171 + $0x31] sm:$0xff]
        %v1279 = vld [vmem:[%s1171 + $0x39] sm:$0xff]
        %v1280 = vld [vmem:[%s1171 + $0x49] sm:$0xff]
        %v1281 = vld [vmem:[%s1171 + $0x51] sm:$0xff]
        %v1282 = vld [vmem:[%s1171 + $0x61] sm:$0xff]
        %v1283 = vld [vmem:[%s1171 + $0x69] sm:$0xff]
        %v1284 = vld [vmem:[%s1171 + $0x79] sm:$0xff]
        %v1285 = vld [vmem:[%s1171 + $0x81] sm:$0xff]
        %v1286 = vld [vmem:[%s1171 + $0x91] sm:$0xff]
        %v1287 = vld [vmem:[%s1171 + $0x99] sm:$0xff]
        %v1288 = vld [vmem:[%s1171 + $0xa9] sm:$0xff]
        %v1289 = vld [vmem:[%s1171 + $0xb1] sm:$0xff]
        %v1290 = vld [vmem:[%s1171 + $0xc1] sm:$0xff]
        %v1291 = vld [vmem:[%s1171 + $0xc9] sm:$0xff]
        %v1292 = vld [vmem:[%s1171 + $0xd9] sm:$0xff]
        %v1293 = vld [vmem:[%s1171 + $0xe1] sm:$0xff]
        %v1294 = vld [vmem:[%s1171 + $0xf1] sm:$0xff]
        %v1295 = vld [vmem:[%s1171 + $0xf9] sm:$0xff]
        %v1296 = vld [vmem:[%s1171 + $0x109] sm:$0xff]
        %v1297 = vld [vmem:[%s1171 + $0x111] sm:$0xff]
        %v1298 = vld [vmem:[%s1171 + $0x121] sm:$0xff]
        %v1299 = vld [vmem:[%s1171 + $0x129] sm:$0xff]
        %v1300 = vld [vmem:[%s1171 + $0x139] sm:$0xff]
        %v1301 = vld [vmem:[%s1171 + $0x141] sm:$0xff]
        %v1302 = vld [vmem:[%s1171 + $0x151] sm:$0xff]
        %v1303 = vld [vmem:[%s1171 + $0x159] sm:$0xff]
        %v1304 = vld [vmem:[%s1171 + $0x169] sm:$0xff]
        %v1305 = vld [vmem:[%s1171 + $0x171] sm:$0xff]
        %v1306 = vld [vmem:[%s1204 + $0x1] sm:$0x1]
        %v1307 = vlaneseq
        %v1308 = vshrl.u32 %v1307, 7
        %v1309 = vsub.s32 0, %v1308
        %v1310 = vrot.slane %v1306, %v1309
        %v1311 = vmul.f32 %v1274, %v1310
        %v1312 = vmul.f32 %v1275, %v1310
        %v1313 = vmul.f32 %v1276, %v1310
        %v1314 = vmul.f32 %v1277, %v1310
        %v1315 = vmul.f32 %v1278, %v1310
        %v1316 = vmul.f32 %v1279, %v1310
        %v1317 = vmul.f32 %v1280, %v1310
        %v1318 = vmul.f32 %v1281, %v1310
        %v1319 = vmul.f32 %v1282, %v1310
        %v1320 = vmul.f32 %v1283, %v1310
        %v1321 = vmul.f32 %v1284, %v1310
        %v1322 = vmul.f32 %v1285, %v1310
        %v1323 = vmul.f32 %v1286, %v1310
        %v1324 = vmul.f32 %v1287, %v1310
        %v1325 = vmul.f32 %v1288, %v1310
        %v1326 = vmul.f32 %v1289, %v1310
        %v1327 = vmul.f32 %v1290, %v1310
        %v1328 = vmul.f32 %v1291, %v1310
        %v1329 = vmul.f32 %v1292, %v1310
        %v1330 = vmul.f32 %v1293, %v1310
        %v1331 = vmul.f32 %v1294, %v1310
        %v1332 = vmul.f32 %v1295, %v1310
        %v1333 = vmul.f32 %v1296, %v1310
        %v1334 = vmul.f32 %v1297, %v1310
        %v1335 = vmul.f32 %v1298, %v1310
        %v1336 = vmul.f32 %v1299, %v1310
        %v1337 = vmul.f32 %v1300, %v1310
        %v1338 = vmul.f32 %v1301, %v1310
        %v1339 = vmul.f32 %v1302, %v1310
        %v1340 = vmul.f32 %v1303, %v1310
        %v1341 = vmul.f32 %v1304, %v1310
        %v1342 = vmul.f32 %v1305, %v1310
        %v1343 = vadd.f32 %v1242, %v1311
        %v1344 = vadd.f32 %v1243, %v1312
        %v1345 = vadd.f32 %v1244, %v1313
        %v1346 = vadd.f32 %v1245, %v1314
        %v1347 = vadd.f32 %v1246, %v1315
        %v1348 = vadd.f32 %v1247, %v1316
        %v1349 = vadd.f32 %v1248, %v1317
        %v1350 = vadd.f32 %v1249, %v1318
        %v1351 = vadd.f32 %v1250, %v1319
        %v1352 = vadd.f32 %v1251, %v1320
        %v1353 = vadd.f32 %v1252, %v1321
        %v1354 = vadd.f32 %v1253, %v1322
        %v1355 = vadd.f32 %v1254, %v1323
        %v1356 = vadd.f32 %v1255, %v1324
        %v1357 = vadd.f32 %v1256, %v1325
        %v1358 = vadd.f32 %v1257, %v1326
        %v1359 = vadd.f32 %v1258, %v1327
        %v1360 = vadd.f32 %v1259, %v1328
        %v1361 = vadd.f32 %v1260, %v1329
        %v1362 = vadd.f32 %v1261, %v1330
        %v1363 = vadd.f32 %v1262, %v1331
        %v1364 = vadd.f32 %v1263, %v1332
        %v1365 = vadd.f32 %v1264, %v1333
        %v1366 = vadd.f32 %v1265, %v1334
        %v1367 = vadd.f32 %v1266, %v1335
        %v1368 = vadd.f32 %v1267, %v1336
        %v1369 = vadd.f32 %v1268, %v1337
        %v1370 = vadd.f32 %v1269, %v1338
        %v1371 = vadd.f32 %v1270, %v1339
        %v1372 = vadd.f32 %v1271, %v1340
        %v1373 = vadd.f32 %v1272, %v1341
        %v1374 = vadd.f32 %v1273, %v1342
        %v1375 = vld [vmem:[%s1171 + $0x2] sm:$0xff]
        %v1376 = vld [vmem:[%s1171 + $0xa] sm:$0xff]
        %v1377 = vld [vmem:[%s1171 + $0x1a] sm:$0xff]
        %v1378 = vld [vmem:[%s1171 + $0x22] sm:$0xff]
        %v1379 = vld [vmem:[%s1171 + $0x32] sm:$0xff]
        %v1380 = vld [vmem:[%s1171 + $0x3a] sm:$0xff]
        %v1381 = vld [vmem:[%s1171 + $0x4a] sm:$0xff]
        %v1382 = vld [vmem:[%s1171 + $0x52] sm:$0xff]
        %v1383 = vld [vmem:[%s1171 + $0x62] sm:$0xff]
        %v1384 = vld [vmem:[%s1171 + $0x6a] sm:$0xff]
        %v1385 = vld [vmem:[%s1171 + $0x7a] sm:$0xff]
        %v1386 = vld [vmem:[%s1171 + $0x82] sm:$0xff]
        %v1387 = vld [vmem:[%s1171 + $0x92] sm:$0xff]
        %v1388 = vld [vmem:[%s1171 + $0x9a] sm:$0xff]
        %v1389 = vld [vmem:[%s1171 + $0xaa] sm:$0xff]
        %v1390 = vld [vmem:[%s1171 + $0xb2] sm:$0xff]
        %v1391 = vld [vmem:[%s1171 + $0xc2] sm:$0xff]
        %v1392 = vld [vmem:[%s1171 + $0xca] sm:$0xff]
        %v1393 = vld [vmem:[%s1171 + $0xda] sm:$0xff]
        %v1394 = vld [vmem:[%s1171 + $0xe2] sm:$0xff]
        %v1395 = vld [vmem:[%s1171 + $0xf2] sm:$0xff]
        %v1396 = vld [vmem:[%s1171 + $0xfa] sm:$0xff]
        %v1397 = vld [vmem:[%s1171 + $0x10a] sm:$0xff]
        %v1398 = vld [vmem:[%s1171 + $0x112] sm:$0xff]
        %v1399 = vld [vmem:[%s1171 + $0x122] sm:$0xff]
        %v1400 = vld [vmem:[%s1171 + $0x12a] sm:$0xff]
        %v1401 = vld [vmem:[%s1171 + $0x13a] sm:$0xff]
        %v1402 = vld [vmem:[%s1171 + $0x142] sm:$0xff]
        %v1403 = vld [vmem:[%s1171 + $0x152] sm:$0xff]
        %v1404 = vld [vmem:[%s1171 + $0x15a] sm:$0xff]
        %v1405 = vld [vmem:[%s1171 + $0x16a] sm:$0xff]
        %v1406 = vld [vmem:[%s1171 + $0x172] sm:$0xff]
        %v1407 = vld [vmem:[%s1204 + $0x2] sm:$0x1]
        %v1408 = vlaneseq
        %v1409 = vshrl.u32 %v1408, 7
        %v1410 = vsub.s32 0, %v1409
        %v1411 = vrot.slane %v1407, %v1410
        %v1412 = vmul.f32 %v1375, %v1411
        %v1413 = vmul.f32 %v1376, %v1411
        %v1414 = vmul.f32 %v1377, %v1411
        %v1415 = vmul.f32 %v1378, %v1411
        %v1416 = vmul.f32 %v1379, %v1411
        %v1417 = vmul.f32 %v1380, %v1411
        %v1418 = vmul.f32 %v1381, %v1411
        %v1419 = vmul.f32 %v1382, %v1411
        %v1420 = vmul.f32 %v1383, %v1411
        %v1421 = vmul.f32 %v1384, %v1411
        %v1422 = vmul.f32 %v1385, %v1411
        %v1423 = vmul.f32 %v1386, %v1411
        %v1424 = vmul.f32 %v1387, %v1411
        %v1425 = vmul.f32 %v1388, %v1411
        %v1426 = vmul.f32 %v1389, %v1411
        %v1427 = vmul.f32 %v1390, %v1411
        %v1428 = vmul.f32 %v1391, %v1411
        %v1429 = vmul.f32 %v1392, %v1411
        %v1430 = vmul.f32 %v1393, %v1411
        %v1431 = vmul.f32 %v1394, %v1411
        %v1432 = vmul.f32 %v1395, %v1411
        %v1433 = vmul.f32 %v1396, %v1411
        %v1434 = vmul.f32 %v1397, %v1411
        %v1435 = vmul.f32 %v1398, %v1411
        %v1436 = vmul.f32 %v1399, %v1411
        %v1437 = vmul.f32 %v1400, %v1411
        %v1438 = vmul.f32 %v1401, %v1411
        %v1439 = vmul.f32 %v1402, %v1411
        %v1440 = vmul.f32 %v1403, %v1411
        %v1441 = vmul.f32 %v1404, %v1411
        %v1442 = vmul.f32 %v1405, %v1411
        %v1443 = vmul.f32 %v1406, %v1411
        %v1444 = vadd.f32 %v1343, %v1412
        %v1445 = vadd.f32 %v1344, %v1413
        %v1446 = vadd.f32 %v1345, %v1414
        %v1447 = vadd.f32 %v1346, %v1415
        %v1448 = vadd.f32 %v1347, %v1416
        %v1449 = vadd.f32 %v1348, %v1417
        %v1450 = vadd.f32 %v1349, %v1418
        %v1451 = vadd.f32 %v1350, %v1419
        %v1452 = vadd.f32 %v1351, %v1420
        %v1453 = vadd.f32 %v1352, %v1421
        %v1454 = vadd.f32 %v1353, %v1422
        %v1455 = vadd.f32 %v1354, %v1423
        %v1456 = vadd.f32 %v1355, %v1424
        %v1457 = vadd.f32 %v1356, %v1425
        %v1458 = vadd.f32 %v1357, %v1426
        %v1459 = vadd.f32 %v1358, %v1427
        %v1460 = vadd.f32 %v1359, %v1428
        %v1461 = vadd.f32 %v1360, %v1429
        %v1462 = vadd.f32 %v1361, %v1430
        %v1463 = vadd.f32 %v1362, %v1431
        %v1464 = vadd.f32 %v1363, %v1432
        %v1465 = vadd.f32 %v1364, %v1433
        %v1466 = vadd.f32 %v1365, %v1434
        %v1467 = vadd.f32 %v1366, %v1435
        %v1468 = vadd.f32 %v1367, %v1436
        %v1469 = vadd.f32 %v1368, %v1437
        %v1470 = vadd.f32 %v1369, %v1438
        %v1471 = vadd.f32 %v1370, %v1439
        %v1472 = vadd.f32 %v1371, %v1440
        %v1473 = vadd.f32 %v1372, %v1441
        %v1474 = vadd.f32 %v1373, %v1442
        %v1475 = vadd.f32 %v1374, %v1443
        %1476 = vst [vmem:[%s421] sm:$0xff] %v1444
        %1477 = vst [vmem:[%s421 + $0x8] sm:$0xff] %v1445
        %1478 = vst [vmem:[%s421 + $0x10] sm:$0xff] %v1446
        %1479 = vst [vmem:[%s421 + $0x18] sm:$0xff] %v1447
        %1480 = vst [vmem:[%s421 + $0x20] sm:$0xff] %v1448
        %1481 = vst [vmem:[%s421 + $0x28] sm:$0xff] %v1449
        %1482 = vst [vmem:[%s421 + $0x30] sm:$0xff] %v1450
        %1483 = vst [vmem:[%s421 + $0x38] sm:$0xff] %v1451
        %1484 = vst [vmem:[%s421 + $0x40] sm:$0xff] %v1452
        %1485 = vst [vmem:[%s421 + $0x48] sm:$0xff] %v1453
        %1486 = vst [vmem:[%s421 + $0x50] sm:$0xff] %v1454
        %1487 = vst [vmem:[%s421 + $0x58] sm:$0xff] %v1455
        %1488 = vst [vmem:[%s421 + $0x60] sm:$0xff] %v1456
        %1489 = vst [vmem:[%s421 + $0x68] sm:$0xff] %v1457
        %1490 = vst [vmem:[%s421 + $0x70] sm:$0xff] %v1458
        %1491 = vst [vmem:[%s421 + $0x78] sm:$0xff] %v1459
        %1492 = vst [vmem:[%s421 + $0x80] sm:$0xff] %v1460
        %1493 = vst [vmem:[%s421 + $0x88] sm:$0xff] %v1461
        %1494 = vst [vmem:[%s421 + $0x90] sm:$0xff] %v1462
        %1495 = vst [vmem:[%s421 + $0x98] sm:$0xff] %v1463
        %1496 = vst [vmem:[%s421 + $0xa0] sm:$0xff] %v1464
        %1497 = vst [vmem:[%s421 + $0xa8] sm:$0xff] %v1465
        %1498 = vst [vmem:[%s421 + $0xb0] sm:$0xff] %v1466
        %1499 = vst [vmem:[%s421 + $0xb8] sm:$0xff] %v1467
        %1500 = vst [vmem:[%s421 + $0xc0] sm:$0xff] %v1468
        %1501 = vst [vmem:[%s421 + $0xc8] sm:$0xff] %v1469
        %1502 = vst [vmem:[%s421 + $0xd0] sm:$0xff] %v1470
        %1503 = vst [vmem:[%s421 + $0xd8] sm:$0xff] %v1471
        %1504 = vst [vmem:[%s421 + $0xe0] sm:$0xff] %v1472
        %1505 = vst [vmem:[%s421 + $0xe8] sm:$0xff] %v1473
        %1506 = vst [vmem:[%s421 + $0xf0] sm:$0xff] %v1474
        %1507 = vst [vmem:[%s421 + $0xf8] sm:$0xff] %v1475
        %s1508 = sand.u32 %s215, 1
        %s1509 = scalar_lea.sflag [#allocation5], %s1508
        %s1510 = sand.u32 %s215, 1
        %s1511 = smul.addr %s1510, 256
        %s1512 = scalar_lea.vmem [#allocation11], %s1511
        // Predicated region
        $region57: #{tpu_custom_call.1} parent=39 // pred_check
          %p1513 = pneg %p225
        $region58: #{tpu_custom_call.1} parent=39 // pred_check_branch
          %1515 = sbr.rel (%p1513) target = $region60
        $region59: #{tpu_custom_call.1} parent=39 // pred_region
          %s1516 = smul.u32 16, %s33
          %s1518 = ssub.s32 4096, 4096
          %1519 = vsyncadd %s1509, %s1518
          %s1520 = smul.addr %s1516, 2
          %s1521 = sadd.s32 %s32, %s1520
          %s1522 = smul.addr %s31, 32
          %s1523 = sadd.s32 %s1521, %s1522
          %s1524 = smul.addr %s1523, 128
          %s1525 = scalar_lea.hbm %s5, %s1524
          %s1526 = sshll.u32 %s1512, 4
          %s1527 = int_to_ptr.vmem [resolvable:$true] %s1526
          %1532 = dma.vmem_to_hbm [thread:$0]  %s1527, 4096, %s1525, %s1509, 128, 128, 8
        $region60: #{tpu_custom_call.1} parent=39 // pred_fallthru
          _
      $region40: #{tpu_custom_call.1} parent=5 // pred_fallthru
        _
      %p1533 = scmp.le.s32.totalorder 2, %s21
      // Predicated region
      $region61: #{tpu_custom_call.1} parent=5 // pred_check
        %p1534 = pneg %p1533
      $region62: #{tpu_custom_call.1} parent=5 // pred_check_branch
        %1536 = sbr.rel (%p1534) target = $region64
      $region63: #{tpu_custom_call.1} parent=5 // pred_region
        %s1537 = ssub.s32 %s21, 2
        // Predicated region
        $region65: #{tpu_custom_call.1} parent=63 // pred_check
          %p1538 = pneg %p231
        $region66: #{tpu_custom_call.1} parent=63 // pred_check_branch
          %1540 = sbr.rel (%p1538) target = $region68
        $region67: #{tpu_custom_call.1} parent=63 // pred_region
          %s1541 = sand.u32 %s216, 1
          %s1542 = scalar_lea.sflag [#allocation5], %s1541
          %s1543 = sand.u32 %s216, 1
          %s1544 = smul.addr %s1543, 256
          %s1545 = scalar_lea.vmem [#allocation11], %s1544
          %1546 = dma.done %s1542, 4096
        $region68: #{tpu_custom_call.1} parent=63 // pred_fallthru
          _
      $region64: #{tpu_custom_call.1} parent=5 // pred_fallthru
        _
    $region6: #{tpu_custom_call.1} parent=1 // loop_footer
      %s25 = sadd.s32 1, %s21
    $region7: #{tpu_custom_call.1} parent=1 // loop_footer_branch
      %20 = sbr.rel target = $region3
    $region8: #{tpu_custom_call.1} parent=1 // loop_exit
      _
    %1547 = vsyncpa [#allocation4], 1
    %s1548 = scalar_lea.sflag [#allocation4], 1
    %1549 = vsyncpa %s1548, 1
    %1550 = vsyncpa [#allocation7], 1
    %s1551 = scalar_lea.sflag [#allocation7], 1
    %1552 = vsyncpa %s1551, 1
    %1553 = vsyncpa [#allocation10], 1
    %1554 = vsyncpa [#allocation5], 1
    %s1555 = scalar_lea.sflag [#allocation5], 1
    %1556 = vsyncpa %s1555, 1

</llo_original>
